<compile_context>
chip_gen: v6e
topology: v6e:2x2x1
jax: 0.10.0
libtpu: 0.0.40
codegen_flags: <defaults>
</compile_context>

<pallas_src>
import jax
import jax.numpy as jnp
from jax.experimental import pallas as pl
from jax.experimental.pallas import tpu as pltpu


# ---------------------------------------------------------------------------
# Fused kernel: conv7x7/s2 (as 8 K=48 matmuls) + folded BN + ReLU + maxpool3x3/s2
# ---------------------------------------------------------------------------
def stem_kernel(xe_ref, xo_ref, w_ref, b_ref, o_ref):
    # xe_ref / xo_ref : (1, Hs, Wo2, 48) bf16  -- even / odd conv-output columns
    # w_ref           : (4, 48, Cout)    bf16  -- BN-scale-folded weights, one slab per kh-pair
    # b_ref           : (1, Cout)        f32   -- folded BN bias
    # o_ref           : (1, Ho2, Wo2, Cout) f32 -- pooled output
    _, Hs, Wo2, F = xe_ref.shape
    Ho = Hs - 3
    Ho2 = Ho // 2
    Cout = o_ref.shape[3]

    def conv_half(x_ref):
        # 7x7/s2 conv (+BN bias+ReLU) for one column parity: 4 accumulated K=48 matmuls
        # over unit-stride slices of the VMEM-resident input block.
        acc = None
        for bh in range(4):
            slab = x_ref[0, pl.ds(bh, Ho), :, :].reshape(Ho * Wo2, F)   # (M, 48) bf16
            p = jnp.dot(slab, w_ref[bh], preferred_element_type=jnp.float32)
            acc = p if acc is None else acc + p
        y = jnp.maximum(acc + b_ref[...], 0.0)                          # f32 epilogue
        return y.reshape(Ho, Wo2, Cout)

    y_even = conv_half(xe_ref)     # conv output columns 0, 2, 4, ...
    y_odd = conv_half(xo_ref)      # conv output columns 1, 3, 5, ...

    # ---- 3x3 / stride 2 / pad 1 max-pool (post-ReLU values >= 0 -> pad with 0) ----
    # W direction: window cols {2*w2-1, 2*w2, 2*w2+1}
    zcol = jnp.zeros((Ho, 1, Cout), jnp.float32)
    y_odd_left = jnp.concatenate([zcol, y_odd[:, :Wo2 - 1, :]], axis=1)
    wmax = jnp.maximum(jnp.maximum(y_even, y_odd), y_odd_left)          # (Ho, Wo2, C)

    # H direction: window rows {2*h2-1, 2*h2, 2*h2+1} (leading-dim split is free)
    wmax4 = wmax.reshape(Ho2, 2, Wo2, Cout)
    h_even = wmax4[:, 0, :, :]
    h_odd = wmax4[:, 1, :, :]
    zrow = jnp.zeros((1, Wo2, Cout), jnp.float32)
    h_odd_up = jnp.concatenate([zrow, h_odd[:Ho2 - 1, :, :]], axis=0)
    o_ref[0] = jnp.maximum(jnp.maximum(h_even, h_odd), h_odd_up)


def resnet_stem_pallas(xw_e, xw_o, w_k, bias):
    N, Hs, Wo2, F = xw_e.shape
    Cout = w_k.shape[2]
    Ho = Hs - 3
    Ho2 = Ho // 2
    return pl.pallas_call(
        stem_kernel,
        out_shape=jax.ShapeDtypeStruct((N, Ho2, Wo2, Cout), jnp.float32),
        grid_spec=pltpu.PrefetchScalarGridSpec(
            num_scalar_prefetch=0,
            grid=(N,),
            in_specs=[
                pl.BlockSpec((1, Hs, Wo2, F), lambda n: (n, 0, 0, 0)),
                pl.BlockSpec((1, Hs, Wo2, F), lambda n: (n, 0, 0, 0)),
                pl.BlockSpec((4, F, Cout), lambda n: (0, 0, 0)),
                pl.BlockSpec((1, Cout), lambda n: (0, 0)),
            ],
            out_specs=pl.BlockSpec((1, Ho2, Wo2, Cout), lambda n: (n, 0, 0, 0)),
        ),
        compiler_params=pltpu.CompilerParams(
            dimension_semantics=("parallel",),
            vmem_limit_bytes=48 * 1024 * 1024,   # stays under v7x's 64 MiB physical VMEM
        ),
    )(xw_e, xw_o, w_k, bias)


# ---------------------------------------------------------------------------
# visible_module forward (share_net = 1): NCHW in, NCHW out (PyTorch contract)
# ---------------------------------------------------------------------------
@jax.jit
def visible_module_forward(x_nchw, conv_w, bn_gamma, bn_beta, bn_mean, bn_var):
    eps = 1e-5
    N, Cin, H, W = x_nchw.shape
    Cout, _, KH, KW = conv_w.shape          # (64, 3, 7, 7)
    assert (Cin, KH, KW) == (3, 7, 7)
    assert H % 4 == 0 and W % 32 == 0, "fused stem kernel expects H % 4 == 0, W % 32 == 0"

    Ho, Wo = H // 2, W // 2                 # conv output spatial (stride 2, pad 3)
    Ho2, Wo2 = Ho // 2, Wo // 2             # pooled output spatial
    Hs, Wsd = (H + 6) // 2, (W + 6) // 2    # space-to-depth spatial

    # ---- input prep: cheap relayout (~4.3x input bytes) instead of the 12x im2col ----
    x = jnp.transpose(x_nchw, (0, 2, 3, 1)).astype(jnp.bfloat16)         # NHWC bf16
    xp = jnp.pad(x, ((0, 0), (3, 3), (3, 3), (0, 0)))                    # (N, H+6, W+6, 3)
    # space-to-depth 2x2: xs[n, i, j, di*6 + dj*3 + c] = xp[n, 2i+di, 2j+dj, c]
    xs = xp.reshape(N, Hs, 2, Wsd, 2, Cin)
    xs = jnp.transpose(xs, (0, 1, 3, 2, 4, 5)).reshape(N, Hs, Wsd, 4 * Cin)
    # kw-unfold: xw[n, i, wo, bw*12 + g] = xs[n, i, wo + bw, g], bw = 0..3
    xw = jnp.concatenate([xs[:, :, bw:bw + Wo, :] for bw in range(4)], axis=-1)
    # split by conv-output column parity so the pool needs no strided loads in-kernel
    xw_e = xw[:, :, 0::2, :]                                             # (N, Hs, Wo2, 48)
    xw_o = xw[:, :, 1::2, :]

    # ---- fold BN into weights / bias ----
    inv_std = jax.lax.rsqrt(bn_var.astype(jnp.float32) + eps)
    scale = bn_gamma * inv_std                                           # (Cout,)
    bias = (bn_beta - bn_mean * scale).reshape(1, Cout).astype(jnp.float32)

    # weights: (Cout, Cin, 7, 7) * scale -> pad to 8x8 -> (4, 48, Cout) bf16,
    # feature order per bh: (bw, di, dj, c) matching xw's last axis.
    w8 = jnp.pad(conv_w.astype(jnp.float32) * scale[:, None, None, None],
                 ((0, 0), (0, 0), (0, 1), (0, 1)))                       # (Cout, Cin, 8, 8)
    wk = w8.reshape(Cout, Cin, 4, 2, 4, 2)                               # (co, c, bh, di, bw, dj)
    wk = jnp.transpose(wk, (2, 4, 3, 5, 1, 0))                           # (bh, bw, di, dj, c, co)
    wk = wk.reshape(4, 4 * 2 * 2 * Cin, Cout).astype(jnp.bfloat16)       # (4, 48, Cout)

    out = resnet_stem_pallas(xw_e, xw_o, wk, bias)                       # (N, Ho2, Wo2, Cout) f32
    # back to the module's NCHW contract (drop this transpose if the consumer takes NHWC)
    return jnp.transpose(out, (0, 3, 1, 2))


# ---------------------------------------------------------------------------
# Reference (pure XLA, f32) for a sanity check
# ---------------------------------------------------------------------------
def reference_forward(x_nchw, conv_w, bn_gamma, bn_beta, bn_mean, bn_var):
    eps = 1e-5
    y = jax.lax.conv_general_dilated(
        x_nchw, conv_w, window_strides=(2, 2), padding=((3, 3), (3, 3)),
        dimension_numbers=("NCHW", "OIHW", "NCHW"))
    inv_std = 1.0 / jnp.sqrt(bn_var + eps)
    y = (y - bn_mean[None, :, None, None]) * (bn_gamma * inv_std)[None, :, None, None] \
        + bn_beta[None, :, None, None]
    y = jnp.maximum(y, 0.0)
    y = jax.lax.reduce_window(
        y, -jnp.inf, jax.lax.max,
        window_dimensions=(1, 1, 3, 3), window_strides=(1, 1, 2, 2),
        padding=((0, 0), (0, 0), (1, 1), (1, 1)))
    return y


if __name__ == "__main__":
    key = jax.random.PRNGKey(0)
    k_x, k_w, k_g, k_b, k_m, k_v = jax.random.split(key, 6)

    # small shapes consistent with the ResNet stem (Cin must be 3)
    N, Cin, H, W = 2, 3, 32, 32
    Cout, KH, KW = 64, 7, 7

    x = jax.random.normal(k_x, (N, Cin, H, W), dtype=jnp.float32)
    conv_w = jax.random.normal(k_w, (Cout, Cin, KH, KW), dtype=jnp.float32) * 0.05
    bn_gamma = 1.0 + 0.1 * jax.random.normal(k_g, (Cout,), dtype=jnp.float32)
    bn_beta = 0.1 * jax.random.normal(k_b, (Cout,), dtype=jnp.float32)
    bn_mean = 0.1 * jax.random.normal(k_m, (Cout,), dtype=jnp.float32)
    bn_var = jnp.abs(jax.random.normal(k_v, (Cout,), dtype=jnp.float32)) + 0.5

    out = jax.block_until_ready(
        visible_module_forward(x, conv_w, bn_gamma, bn_beta, bn_mean, bn_var))
    ref = jax.block_until_ready(
        reference_forward(x, conv_w, bn_gamma, bn_beta, bn_mean, bn_var))

    assert out.shape == (N, Cout, 8, 8), out.shape
    max_err = float(jnp.max(jnp.abs(out - ref)))
    # bf16 operands -> loose-but-meaningful tolerance (real layout bugs give O(1) errors)
    assert jnp.allclose(out, ref, atol=1e-1, rtol=5e-2), max_err

    print("KERNEL_OK")
</pallas_src>

<mosaic_0001>
module attributes {stable_mosaic.version = 11 : i64} {
  func.func @stem_kernel(%arg0: i32, %arg1: memref<1x19x8x48xbf16, #tpu.memory_space<vmem>>, %arg2: memref<1x19x8x48xbf16, #tpu.memory_space<vmem>>, %arg3: memref<4x48x64xbf16, #tpu.memory_space<vmem>>, %arg4: memref<1x64xf32, #tpu.memory_space<vmem>>, %arg5: memref<1x8x8x64xf32, #tpu.memory_space<vmem>>) attributes {dimension_semantics = [#tpu.dimension_semantics<parallel>], iteration_bounds = array<i64: 2>, scalar_prefetch = 0 : i64, scratch_operands = 0 : i64, tpu.core_type = #tpu.core_type<tc>, window_params = [{transform_indices = @transform_0, window_bounds = array<i64: 1, 19, 8, 48>}, {transform_indices = @transform_1, window_bounds = array<i64: 1, 19, 8, 48>}, {pipeline_mode = #tpu.pipeline_mode<synchronous>, transform_indices = @transform_2, window_bounds = array<i64: 4, 48, 64>}, {pipeline_mode = #tpu.pipeline_mode<synchronous>, transform_indices = @transform_3, window_bounds = array<i64: 1, 64>}, {transform_indices = @transform_4, window_bounds = array<i64: 1, 8, 8, 64>}]} {
    %c0 = arith.constant 0 : index
    %c0_0 = arith.constant 0 : index
    %c0_1 = arith.constant 0 : index
    %c0_2 = arith.constant 0 : index
    %0 = vector.load %arg1[%c0, %c0_0, %c0_1, %c0_2] : memref<1x19x8x48xbf16, #tpu.memory_space<vmem>>, vector<1x16x8x48xbf16>
    %1 = vector.shape_cast %0 : vector<1x16x8x48xbf16> to vector<16x8x48xbf16>
    %2 = vector.shape_cast %1 : vector<16x8x48xbf16> to vector<128x48xbf16>
    %c0_3 = arith.constant 0 : index
    %c0_4 = arith.constant 0 : index
    %c0_5 = arith.constant 0 : index
    %3 = vector.load %arg3[%c0_3, %c0_4, %c0_5] : memref<4x48x64xbf16, #tpu.memory_space<vmem>>, vector<1x48x64xbf16>
    %4 = vector.shape_cast %3 : vector<1x48x64xbf16> to vector<48x64xbf16>
    %cst = arith.constant dense<0.000000e+00> : vector<128x64xf32>
    %5 = tpu.matmul %2, %4, %cst {dimension_numbers = #tpu.dot_dimension_numbers<[1], [0], [0], [1], [0, 0, 1, 1], [], []>} : vector<128x48xbf16>, vector<48x64xbf16>, vector<128x64xf32> -> vector<128x64xf32>
    %c0_6 = arith.constant 0 : index
    %c1 = arith.constant 1 : index
    %c0_7 = arith.constant 0 : index
    %c0_8 = arith.constant 0 : index
    %6 = vector.load %arg1[%c0_6, %c1, %c0_7, %c0_8] : memref<1x19x8x48xbf16, #tpu.memory_space<vmem>>, vector<1x16x8x48xbf16>
    %7 = vector.shape_cast %6 : vector<1x16x8x48xbf16> to vector<16x8x48xbf16>
    %8 = vector.shape_cast %7 : vector<16x8x48xbf16> to vector<128x48xbf16>
    %c1_9 = arith.constant 1 : index
    %c0_10 = arith.constant 0 : index
    %c0_11 = arith.constant 0 : index
    %9 = vector.load %arg3[%c1_9, %c0_10, %c0_11] : memref<4x48x64xbf16, #tpu.memory_space<vmem>>, vector<1x48x64xbf16>
    %10 = vector.shape_cast %9 : vector<1x48x64xbf16> to vector<48x64xbf16>
    %cst_12 = arith.constant dense<0.000000e+00> : vector<128x64xf32>
    %11 = tpu.matmul %8, %10, %cst_12 {dimension_numbers = #tpu.dot_dimension_numbers<[1], [0], [0], [1], [0, 0, 1, 1], [], []>} : vector<128x48xbf16>, vector<48x64xbf16>, vector<128x64xf32> -> vector<128x64xf32>
    %12 = arith.addf %5, %11 : vector<128x64xf32>
    %c0_13 = arith.constant 0 : index
    %c2 = arith.constant 2 : index
    %c0_14 = arith.constant 0 : index
    %c0_15 = arith.constant 0 : index
    %13 = vector.load %arg1[%c0_13, %c2, %c0_14, %c0_15] : memref<1x19x8x48xbf16, #tpu.memory_space<vmem>>, vector<1x16x8x48xbf16>
    %14 = vector.shape_cast %13 : vector<1x16x8x48xbf16> to vector<16x8x48xbf16>
    %15 = vector.shape_cast %14 : vector<16x8x48xbf16> to vector<128x48xbf16>
    %c2_16 = arith.constant 2 : index
    %c0_17 = arith.constant 0 : index
    %c0_18 = arith.constant 0 : index
    %16 = vector.load %arg3[%c2_16, %c0_17, %c0_18] : memref<4x48x64xbf16, #tpu.memory_space<vmem>>, vector<1x48x64xbf16>
    %17 = vector.shape_cast %16 : vector<1x48x64xbf16> to vector<48x64xbf16>
    %cst_19 = arith.constant dense<0.000000e+00> : vector<128x64xf32>
    %18 = tpu.matmul %15, %17, %cst_19 {dimension_numbers = #tpu.dot_dimension_numbers<[1], [0], [0], [1], [0, 0, 1, 1], [], []>} : vector<128x48xbf16>, vector<48x64xbf16>, vector<128x64xf32> -> vector<128x64xf32>
    %19 = arith.addf %12, %18 : vector<128x64xf32>
    %c0_20 = arith.constant 0 : index
    %c3 = arith.constant 3 : index
    %c0_21 = arith.constant 0 : index
    %c0_22 = arith.constant 0 : index
    %20 = vector.load %arg1[%c0_20, %c3, %c0_21, %c0_22] : memref<1x19x8x48xbf16, #tpu.memory_space<vmem>>, vector<1x16x8x48xbf16>
    %21 = vector.shape_cast %20 : vector<1x16x8x48xbf16> to vector<16x8x48xbf16>
    %22 = vector.shape_cast %21 : vector<16x8x48xbf16> to vector<128x48xbf16>
    %c3_23 = arith.constant 3 : index
    %c0_24 = arith.constant 0 : index
    %c0_25 = arith.constant 0 : index
    %23 = vector.load %arg3[%c3_23, %c0_24, %c0_25] : memref<4x48x64xbf16, #tpu.memory_space<vmem>>, vector<1x48x64xbf16>
    %24 = vector.shape_cast %23 : vector<1x48x64xbf16> to vector<48x64xbf16>
    %cst_26 = arith.constant dense<0.000000e+00> : vector<128x64xf32>
    %25 = tpu.matmul %22, %24, %cst_26 {dimension_numbers = #tpu.dot_dimension_numbers<[1], [0], [0], [1], [0, 0, 1, 1], [], []>} : vector<128x48xbf16>, vector<48x64xbf16>, vector<128x64xf32> -> vector<128x64xf32>
    %26 = arith.addf %19, %25 : vector<128x64xf32>
    %c0_27 = arith.constant 0 : index
    %c0_28 = arith.constant 0 : index
    %27 = vector.load %arg4[%c0_27, %c0_28] : memref<1x64xf32, #tpu.memory_space<vmem>>, vector<1x64xf32>
    %28 = vector.broadcast %27 : vector<1x64xf32> to vector<128x64xf32>
    %29 = arith.addf %26, %28 : vector<128x64xf32>
    %cst_29 = arith.constant 0.000000e+00 : f32
    %30 = vector.broadcast %cst_29 : f32 to vector<128x64xf32>
    %31 = arith.maximumf %29, %30 : vector<128x64xf32>
    %32 = vector.shape_cast %31 : vector<128x64xf32> to vector<16x8x64xf32>
    %c0_30 = arith.constant 0 : index
    %c0_31 = arith.constant 0 : index
    %c0_32 = arith.constant 0 : index
    %c0_33 = arith.constant 0 : index
    %33 = vector.load %arg2[%c0_30, %c0_31, %c0_32, %c0_33] : memref<1x19x8x48xbf16, #tpu.memory_space<vmem>>, vector<1x16x8x48xbf16>
    %34 = vector.shape_cast %33 : vector<1x16x8x48xbf16> to vector<16x8x48xbf16>
    %35 = vector.shape_cast %34 : vector<16x8x48xbf16> to vector<128x48xbf16>
    %c0_34 = arith.constant 0 : index
    %c0_35 = arith.constant 0 : index
    %c0_36 = arith.constant 0 : index
    %36 = vector.load %arg3[%c0_34, %c0_35, %c0_36] : memref<4x48x64xbf16, #tpu.memory_space<vmem>>, vector<1x48x64xbf16>
    %37 = vector.shape_cast %36 : vector<1x48x64xbf16> to vector<48x64xbf16>
    %cst_37 = arith.constant dense<0.000000e+00> : vector<128x64xf32>
    %38 = tpu.matmul %35, %37, %cst_37 {dimension_numbers = #tpu.dot_dimension_numbers<[1], [0], [0], [1], [0, 0, 1, 1], [], []>} : vector<128x48xbf16>, vector<48x64xbf16>, vector<128x64xf32> -> vector<128x64xf32>
    %c0_38 = arith.constant 0 : index
    %c1_39 = arith.constant 1 : index
    %c0_40 = arith.constant 0 : index
    %c0_41 = arith.constant 0 : index
    %39 = vector.load %arg2[%c0_38, %c1_39, %c0_40, %c0_41] : memref<1x19x8x48xbf16, #tpu.memory_space<vmem>>, vector<1x16x8x48xbf16>
    %40 = vector.shape_cast %39 : vector<1x16x8x48xbf16> to vector<16x8x48xbf16>
    %41 = vector.shape_cast %40 : vector<16x8x48xbf16> to vector<128x48xbf16>
    %c1_42 = arith.constant 1 : index
    %c0_43 = arith.constant 0 : index
    %c0_44 = arith.constant 0 : index
    %42 = vector.load %arg3[%c1_42, %c0_43, %c0_44] : memref<4x48x64xbf16, #tpu.memory_space<vmem>>, vector<1x48x64xbf16>
    %43 = vector.shape_cast %42 : vector<1x48x64xbf16> to vector<48x64xbf16>
    %cst_45 = arith.constant dense<0.000000e+00> : vector<128x64xf32>
    %44 = tpu.matmul %41, %43, %cst_45 {dimension_numbers = #tpu.dot_dimension_numbers<[1], [0], [0], [1], [0, 0, 1, 1], [], []>} : vector<128x48xbf16>, vector<48x64xbf16>, vector<128x64xf32> -> vector<128x64xf32>
    %45 = arith.addf %38, %44 : vector<128x64xf32>
    %c0_46 = arith.constant 0 : index
    %c2_47 = arith.constant 2 : index
    %c0_48 = arith.constant 0 : index
    %c0_49 = arith.constant 0 : index
    %46 = vector.load %arg2[%c0_46, %c2_47, %c0_48, %c0_49] : memref<1x19x8x48xbf16, #tpu.memory_space<vmem>>, vector<1x16x8x48xbf16>
    %47 = vector.shape_cast %46 : vector<1x16x8x48xbf16> to vector<16x8x48xbf16>
    %48 = vector.shape_cast %47 : vector<16x8x48xbf16> to vector<128x48xbf16>
    %c2_50 = arith.constant 2 : index
    %c0_51 = arith.constant 0 : index
    %c0_52 = arith.constant 0 : index
    %49 = vector.load %arg3[%c2_50, %c0_51, %c0_52] : memref<4x48x64xbf16, #tpu.memory_space<vmem>>, vector<1x48x64xbf16>
    %50 = vector.shape_cast %49 : vector<1x48x64xbf16> to vector<48x64xbf16>
    %cst_53 = arith.constant dense<0.000000e+00> : vector<128x64xf32>
    %51 = tpu.matmul %48, %50, %cst_53 {dimension_numbers = #tpu.dot_dimension_numbers<[1], [0], [0], [1], [0, 0, 1, 1], [], []>} : vector<128x48xbf16>, vector<48x64xbf16>, vector<128x64xf32> -> vector<128x64xf32>
    %52 = arith.addf %45, %51 : vector<128x64xf32>
    %c0_54 = arith.constant 0 : index
    %c3_55 = arith.constant 3 : index
    %c0_56 = arith.constant 0 : index
    %c0_57 = arith.constant 0 : index
    %53 = vector.load %arg2[%c0_54, %c3_55, %c0_56, %c0_57] : memref<1x19x8x48xbf16, #tpu.memory_space<vmem>>, vector<1x16x8x48xbf16>
    %54 = vector.shape_cast %53 : vector<1x16x8x48xbf16> to vector<16x8x48xbf16>
    %55 = vector.shape_cast %54 : vector<16x8x48xbf16> to vector<128x48xbf16>
    %c3_58 = arith.constant 3 : index
    %c0_59 = arith.constant 0 : index
    %c0_60 = arith.constant 0 : index
    %56 = vector.load %arg3[%c3_58, %c0_59, %c0_60] : memref<4x48x64xbf16, #tpu.memory_space<vmem>>, vector<1x48x64xbf16>
    %57 = vector.shape_cast %56 : vector<1x48x64xbf16> to vector<48x64xbf16>
    %cst_61 = arith.constant dense<0.000000e+00> : vector<128x64xf32>
    %58 = tpu.matmul %55, %57, %cst_61 {dimension_numbers = #tpu.dot_dimension_numbers<[1], [0], [0], [1], [0, 0, 1, 1], [], []>} : vector<128x48xbf16>, vector<48x64xbf16>, vector<128x64xf32> -> vector<128x64xf32>
    %59 = arith.addf %52, %58 : vector<128x64xf32>
    %c0_62 = arith.constant 0 : index
    %c0_63 = arith.constant 0 : index
    %60 = vector.load %arg4[%c0_62, %c0_63] : memref<1x64xf32, #tpu.memory_space<vmem>>, vector<1x64xf32>
    %61 = vector.broadcast %60 : vector<1x64xf32> to vector<128x64xf32>
    %62 = arith.addf %59, %61 : vector<128x64xf32>
    %cst_64 = arith.constant 0.000000e+00 : f32
    %63 = vector.broadcast %cst_64 : f32 to vector<128x64xf32>
    %64 = arith.maximumf %62, %63 : vector<128x64xf32>
    %65 = vector.shape_cast %64 : vector<128x64xf32> to vector<16x8x64xf32>
    %cst_65 = arith.constant 0.000000e+00 : f32
    %66 = vector.broadcast %cst_65 : f32 to vector<16x1x64xf32>
    %67 = vector.extract_strided_slice %65 {offsets = [0, 0, 0], sizes = [16, 7, 64], strides = [1, 1, 1]} : vector<16x8x64xf32> to vector<16x7x64xf32>
    %68 = tpu.concatenate %66, %67 in 1 : vector<16x1x64xf32>, vector<16x7x64xf32> -> vector<16x8x64xf32>
    %69 = arith.maximumf %32, %65 : vector<16x8x64xf32>
    %70 = arith.maximumf %69, %68 : vector<16x8x64xf32>
    %71 = vector.shape_cast %70 : vector<16x8x64xf32> to vector<8x2x8x64xf32>
    %72 = vector.extract_strided_slice %71 {offsets = [0, 0, 0, 0], sizes = [8, 1, 8, 64], strides = [1, 1, 1, 1]} : vector<8x2x8x64xf32> to vector<8x1x8x64xf32>
    %73 = vector.shape_cast %72 : vector<8x1x8x64xf32> to vector<8x8x64xf32>
    %74 = vector.extract_strided_slice %71 {offsets = [0, 1, 0, 0], sizes = [8, 1, 8, 64], strides = [1, 1, 1, 1]} : vector<8x2x8x64xf32> to vector<8x1x8x64xf32>
    %75 = vector.shape_cast %74 : vector<8x1x8x64xf32> to vector<8x8x64xf32>
    %cst_66 = arith.constant 0.000000e+00 : f32
    %76 = vector.broadcast %cst_66 : f32 to vector<1x8x64xf32>
    %77 = vector.extract_strided_slice %75 {offsets = [0, 0, 0], sizes = [7, 8, 64], strides = [1, 1, 1]} : vector<8x8x64xf32> to vector<7x8x64xf32>
    %78 = tpu.concatenate %76, %77 in 0 : vector<1x8x64xf32>, vector<7x8x64xf32> -> vector<8x8x64xf32>
    %79 = arith.maximumf %73, %75 : vector<8x8x64xf32>
    %80 = arith.maximumf %79, %78 : vector<8x8x64xf32>
    %c0_67 = arith.constant 0 : index
    %c0_68 = arith.constant 0 : index
    %c0_69 = arith.constant 0 : index
    %c0_70 = arith.constant 0 : index
    %81 = vector.load %arg5[%c0_67, %c0_68, %c0_69, %c0_70] : memref<1x8x8x64xf32, #tpu.memory_space<vmem>>, vector<1x8x8x64xf32>
    %82 = vector.shape_cast %81 : vector<1x8x8x64xf32> to vector<8x8x64xf32>
    %83 = vector.shape_cast %80 : vector<8x8x64xf32> to vector<1x8x8x64xf32>
    tpu.vector_store %arg5[%c0_67, %c0_68, %c0_69, %c0_70], %83 {strides = array<i32>} : memref<1x8x8x64xf32, #tpu.memory_space<vmem>>, vector<1x8x8x64xf32>,
    return
  }
  func.func @transform_0(%arg0: i32) -> (i32, i32, i32, i32) {
    %c0_i32 = arith.constant 0 : i32
    %c0_i32_0 = arith.constant 0 : i32
    %c0_i32_1 = arith.constant 0 : i32
    %c0_i32_2 = arith.constant 0 : i32
    return %arg0, %c0_i32, %c0_i32_0, %c0_i32_1 : i32, i32, i32, i32
  }
  func.func @transform_1(%arg0: i32) -> (i32, i32, i32, i32) {
    %c0_i32 = arith.constant 0 : i32
    %c0_i32_0 = arith.constant 0 : i32
    %c0_i32_1 = arith.constant 0 : i32
    %c0_i32_2 = arith.constant 0 : i32
    return %arg0, %c0_i32, %c0_i32_0, %c0_i32_1 : i32, i32, i32, i32
  }
  func.func @transform_2(%arg0: i32) -> (i32, i32, i32) {
    %c0_i32 = arith.constant 0 : i32
    %c0_i32_0 = arith.constant 0 : i32
    %c0_i32_1 = arith.constant 0 : i32
    %c0_i32_2 = arith.constant 0 : i32
    return %c0_i32, %c0_i32_0, %c0_i32_1 : i32, i32, i32
  }
  func.func @transform_3(%arg0: i32) -> (i32, i32) {
    %c0_i32 = arith.constant 0 : i32
    %c0_i32_0 = arith.constant 0 : i32
    %c0_i32_1 = arith.constant 0 : i32
    return %c0_i32, %c0_i32_0 : i32, i32
  }
  func.func @transform_4(%arg0: i32) -> (i32, i32, i32, i32) {
    %c0_i32 = arith.constant 0 : i32
    %c0_i32_0 = arith.constant 0 : i32
    %c0_i32_1 = arith.constant 0 : i32
    %c0_i32_2 = arith.constant 0 : i32
    return %arg0, %c0_i32, %c0_i32_0, %c0_i32_1 : i32, i32, i32, i32
  }
}

</mosaic_0001>

<llo_original>
// kernel: visible_module_forward.1
$region0: #{visible_module_forward.1}
  #allocation0 [shape = 'u32[]', space=smem, size = 0x4, offset = 0x4, fixed_abs, tag = 'smem constant byte address 0x4 - core index']
  #allocation1 [shape = 'u32[144,128]{1,0:T(1,128)}', space=vmem, size = 0x12000, scoped, tag = 'internal scratch']
  %s0 = inlined_call_operand.vmem [shape: bf16[2,19,8,48], index: 0, kind: input, shape index: {}]
  %s1 = inlined_call_operand.vmem [shape: bf16[2,19,8,48], index: 1, kind: input, shape index: {}]
  %s2 = inlined_call_operand.vmem [shape: bf16[4,48,64], index: 2, kind: input, shape index: {}]
  %s3 = inlined_call_operand.vmem [shape: f32[1,64], index: 3, kind: input, shape index: {}]
  %s4 = inlined_call_operand.hbm [shape: f32[2,8,8,64], index: 4, kind: output, shape index: {}]
  %s5 = sld [smem:[#allocation0]]
  $region49: #{visible_module_forward.1} parent=0
    _
  %s7 = ssub.s32 1, %s5
  %s8 = scalar_select 0, %s7, %s5
  $region1: #{visible_module_forward.1} parent=0
    #allocation2 [shape = 'u8[65536]{0}', space=vmem, size = 0x10000, scoped, tag = 'output window, operand 0']
    #allocation3 [shape = 's32[2]{0}', space=sflag, size = 0x8, scoped, tag = 'scoped memory for visible_module_forward.1']
    %9 = vsyncpa [#allocation3], 0
    %s10 = scalar_lea.sflag [#allocation3], 1
    %11 = vsyncpa %s10, 0
    loop: start=0, step=1, limit=4
    $region2: #{visible_module_forward.1} parent=1 // loop_pre_header
      _
    $region3: #{visible_module_forward.1} parent=1 // loop_header
      %s13 = sphi 0, %s17
      %p14 = scmp.ge.s32.totalorder %s13, 4
      %s23 = sphi 0, %s25
      %s26 = sphi 0, %s23
      %s27 = sphi 0, %s26
      %s43 = sphi 0, %s27
      %s49 = sphi 0, %s51
      %s52 = sphi 0, %s49
      %s53 = sphi 0, %s52
      %s69 = sphi 0, %s53
      %s73 = sphi 0, %s73
      %s75 = sphi 0, %s73
      %s76 = sphi 0, %s75
      %s90 = sphi 0, %s76
      %s94 = sphi 0, %s94
      %s96 = sphi 0, %s94
      %s97 = sphi 0, %s96
      %s111 = sphi 0, %s97
      %s117 = sphi 0, %s119
      %s120 = sphi 0, %s117
      %s121 = sphi 0, %s120
      %s137 = sphi 0, %s121
    $region4: #{visible_module_forward.1} parent=1 // loop_header_branch
      %16 = sbr.rel (%p14) target = $region8
    $region5: #{visible_module_forward.1} parent=1 // loop_body
      %s18 = ssub.s32 %s13, 1
      %s19 = ssub.s32 %s13, 2
      %s20 = sadd.s32 %s13, 1
      %s21 = ssub.s32 %s13, %s20
      %p22 = scmp.eq.s32.totalorder %s21, 0
      %s24 = sadd.s32 %s23, 1
      %s25 = scalar_select %p22, %s23, %s24
      %p28 = pneg %p22
      %p29 = scmp.eq.s32.totalorder %s13, 1
      %p30 = por %p28, %p29
      %p31 = scmp.ne.s32.totalorder %s23, %s26
      %p32 = scmp.eq.s32.totalorder %s13, 0
      %p33 = por %p31, %p32
      %p34 = scmp.ne.s32.totalorder %s23, %s26
      %p35 = scmp.eq.s32.totalorder %s18, 1
      %p36 = por %p34, %p35
      %p37 = scmp.ne.s32.totalorder %s26, %s27
      %p38 = scmp.eq.s32.totalorder %s18, 0
      %p39 = por %p37, %p38
      %p40 = scmp.ne.s32.totalorder %s26, %s27
      %p41 = scmp.eq.s32.totalorder %s19, 1
      %p42 = por %p40, %p41
      %p44 = scmp.ne.s32.totalorder %s27, %s43
      %p45 = scmp.eq.s32.totalorder %s19, 0
      %p46 = por %p44, %p45
      %s47 = ssub.s32 %s13, %s20
      %p48 = scmp.eq.s32.totalorder %s47, 0
      %s50 = sadd.s32 %s49, 1
      %s51 = scalar_select %p48, %s49, %s50
      %p54 = pneg %p48
      %p55 = scmp.eq.s32.totalorder %s13, 1
      %p56 = por %p54, %p55
      %p57 = scmp.ne.s32.totalorder %s49, %s52
      %p58 = scmp.eq.s32.totalorder %s13, 0
      %p59 = por %p57, %p58
      %p60 = scmp.ne.s32.totalorder %s49, %s52
      %p61 = scmp.eq.s32.totalorder %s18, 1
      %p62 = por %p60, %p61
      %p63 = scmp.ne.s32.totalorder %s52, %s53
      %p64 = scmp.eq.s32.totalorder %s18, 0
      %p65 = por %p63, %p64
      %p66 = scmp.ne.s32.totalorder %s52, %s53
      %p67 = scmp.eq.s32.totalorder %s19, 1
      %p68 = por %p66, %p67
      %p70 = scmp.ne.s32.totalorder %s53, %s69
      %p71 = scmp.eq.s32.totalorder %s19, 0
      %p72 = por %p70, %p71
      %s74 = sadd.s32 %s73, 1
      %p77 = scmp.eq.s32.totalorder %s13, 1
      %p78 = scmp.ne.s32.totalorder %s73, %s75
      %p79 = scmp.eq.s32.totalorder %s13, 0
      %p80 = por %p78, %p79
      %p81 = scmp.ne.s32.totalorder %s73, %s75
      %p82 = scmp.eq.s32.totalorder %s18, 1
      %p83 = por %p81, %p82
      %p84 = scmp.ne.s32.totalorder %s75, %s76
      %p85 = scmp.eq.s32.totalorder %s18, 0
      %p86 = por %p84, %p85
      %p87 = scmp.ne.s32.totalorder %s75, %s76
      %p88 = scmp.eq.s32.totalorder %s19, 1
      %p89 = por %p87, %p88
      %p91 = scmp.ne.s32.totalorder %s76, %s90
      %p92 = scmp.eq.s32.totalorder %s19, 0
      %p93 = por %p91, %p92
      %s95 = sadd.s32 %s94, 1
      %p98 = scmp.eq.s32.totalorder %s13, 1
      %p99 = scmp.ne.s32.totalorder %s94, %s96
      %p100 = scmp.eq.s32.totalorder %s13, 0
      %p101 = por %p99, %p100
      %p102 = scmp.ne.s32.totalorder %s94, %s96
      %p103 = scmp.eq.s32.totalorder %s18, 1
      %p104 = por %p102, %p103
      %p105 = scmp.ne.s32.totalorder %s96, %s97
      %p106 = scmp.eq.s32.totalorder %s18, 0
      %p107 = por %p105, %p106
      %p108 = scmp.ne.s32.totalorder %s96, %s97
      %p109 = scmp.eq.s32.totalorder %s19, 1
      %p110 = por %p108, %p109
      %p112 = scmp.ne.s32.totalorder %s97, %s111
      %p113 = scmp.eq.s32.totalorder %s19, 0
      %p114 = por %p112, %p113
      %s115 = ssub.s32 %s13, %s20
      %p116 = scmp.eq.s32.totalorder %s115, 0
      %s118 = sadd.s32 %s117, 1
      %s119 = scalar_select %p116, %s117, %s118
      %p122 = pneg %p116
      %p123 = scmp.eq.s32.totalorder %s13, 1
      %p124 = por %p122, %p123
      %p125 = scmp.ne.s32.totalorder %s117, %s120
      %p126 = scmp.eq.s32.totalorder %s13, 0
      %p127 = por %p125, %p126
      %p128 = scmp.ne.s32.totalorder %s117, %s120
      %p129 = scmp.eq.s32.totalorder %s18, 1
      %p130 = por %p128, %p129
      %p131 = scmp.ne.s32.totalorder %s120, %s121
      %p132 = scmp.eq.s32.totalorder %s18, 0
      %p133 = por %p131, %p132
      %p134 = scmp.ne.s32.totalorder %s120, %s121
      %p135 = scmp.eq.s32.totalorder %s19, 1
      %p136 = por %p134, %p135
      %p138 = scmp.ne.s32.totalorder %s121, %s137
      %p139 = scmp.eq.s32.totalorder %s19, 0
      %p140 = por %p138, %p139
      %p141 = scmp.le.s32.totalorder 1, %s13
      %p142 = scmp.lt.s32.totalorder %s13, 3
      %p143 = pnand %p141, %p142
      %p144 = pneg %p143
      // Predicated region
      $region9: #{visible_module_forward.1} parent=5 // pred_check
        _
      $region10: #{visible_module_forward.1} parent=5 // pred_check_branch
        %146 = sbr.rel (%p143) target = $region12
      $region11: #{visible_module_forward.1} parent=5 // pred_region
        %s147 = ssub.s32 %s13, 1
        // Predicated region
        $region13: #{visible_module_forward.1} parent=11 // pred_check
          %p148 = pneg %p86
        $region14: #{visible_module_forward.1} parent=11 // pred_check_branch
          %150 = sbr.rel (%p148) target = $region16
        $region15: #{visible_module_forward.1} parent=11 // pred_region
          _
        $region16: #{visible_module_forward.1} parent=11 // pred_fallthru
          _
        // Predicated region
        $region17: #{visible_module_forward.1} parent=11 // pred_check
          %p151 = pneg %p107
        $region18: #{visible_module_forward.1} parent=11 // pred_check_branch
          %153 = sbr.rel (%p151) target = $region20
        $region19: #{visible_module_forward.1} parent=11 // pred_region
          _
        $region20: #{visible_module_forward.1} parent=11 // pred_fallthru
          _
      $region12: #{visible_module_forward.1} parent=5 // pred_fallthru
        _
      %p154 = scmp.lt.s32.totalorder %s13, 2
      // Predicated region
      $region21: #{visible_module_forward.1} parent=5 // pred_check
        %p155 = pneg %p154
      $region22: #{visible_module_forward.1} parent=5 // pred_check_branch
        %157 = sbr.rel (%p155) target = $region24
      $region23: #{visible_module_forward.1} parent=5 // pred_region
        // Predicated region
        $region25: #{visible_module_forward.1} parent=23 // pred_check
          %p158 = pneg %p33
        $region26: #{visible_module_forward.1} parent=23 // pred_check_branch
          %160 = sbr.rel (%p158) target = $region28
        $region27: #{visible_module_forward.1} parent=23 // pred_region
          %p161 = scmp.lt.s32.totalorder %s13, 1
          %s162 = scalar_select %p161, %s13, 1
          %s163 = smul.addr %s162, 19
          %s164 = smul.addr %s163, 4
          %s165 = scalar_lea.vmem %s0, %s164
        $region28: #{visible_module_forward.1} parent=23 // pred_fallthru
          _
        // Predicated region
        $region29: #{visible_module_forward.1} parent=23 // pred_check
          %p166 = pneg %p59
        $region30: #{visible_module_forward.1} parent=23 // pred_check_branch
          %168 = sbr.rel (%p166) target = $region32
        $region31: #{visible_module_forward.1} parent=23 // pred_region
          %p169 = scmp.lt.s32.totalorder %s13, 1
          %s170 = scalar_select %p169, %s13, 1
          %s171 = smul.addr %s170, 19
          %s172 = smul.addr %s171, 4
          %s173 = scalar_lea.vmem %s1, %s172
        $region32: #{visible_module_forward.1} parent=23 // pred_fallthru
          _
      $region24: #{visible_module_forward.1} parent=5 // pred_fallthru
        _
      %p174 = scmp.le.s32.totalorder 1, %s13
      %p175 = scmp.lt.s32.totalorder %s13, 3
      %p176 = pnand %p174, %p175
      %p177 = pneg %p176
      // Predicated region
      $region33: #{visible_module_forward.1} parent=5 // pred_check
        _
      $region34: #{visible_module_forward.1} parent=5 // pred_check_branch
        %179 = sbr.rel (%p176) target = $region36
      $region35: #{visible_module_forward.1} parent=5 // pred_region
        %s180 = ssub.s32 %s13, 1
        %p181 = scmp.lt.s32.totalorder %s18, 1
        %s182 = scalar_select %p181, %s18, 1
        %s183 = smul.addr %s182, 19
        %s184 = smul.addr %s183, 4
        %s185 = scalar_lea.vmem %s0, %s184
        %p186 = pneg %p39
        %p187 = pneg %p36
        %p188 = scmp.lt.s32.totalorder %s18, 1
        %s189 = scalar_select %p188, %s18, 1
        %s190 = smul.addr %s189, 19
        %s191 = smul.addr %s190, 4
        %s192 = scalar_lea.vmem %s1, %s191
        %p193 = pneg %p65
        %p194 = pneg %p62
        %p195 = pneg %p86
        %p196 = pneg %p83
        %p197 = pneg %p107
        %p198 = pneg %p104
        %p199 = pneg %p133
        %p200 = pneg %p130
        %s201 = sand.u32 %s120, 1
        %s202 = scalar_lea.sflag [#allocation3], %s201
        %s203 = sand.u32 %s120, 1
        %s204 = smul.addr %s203, 64
        %s205 = scalar_lea.vmem [#allocation2], %s204
        %p206 = scmp.lt.s32.totalorder %s18, 1
        %s207 = scalar_select %p206, %s18, 1
        %s208 = smul.addr %s207, 19
        %s209 = smul.addr %s208, 4
        %s210 = scalar_lea.vmem %s0, %s209
        %p211 = scmp.lt.s32.totalorder %s18, 1
        %s212 = scalar_select %p211, %s18, 1
        %s213 = smul.addr %s212, 19
        %s214 = smul.addr %s213, 4
        %s215 = scalar_lea.vmem %s1, %s214
        %v217 = vld [vmem:[%s210] sm:$0xf]
        %v218 = vld [vmem:[%s210 + $0x4] sm:$0xf]
        %v219 = vld [vmem:[%s210 + $0x8] sm:$0xf]
        %v220 = vld [vmem:[%s210 + $0xc] sm:$0xf]
        %v221 = vld [vmem:[%s210 + $0x10] sm:$0xf]
        %v222 = vld [vmem:[%s210 + $0x14] sm:$0xf]
        %v223 = vld [vmem:[%s210 + $0x18] sm:$0xf]
        %v224 = vld [vmem:[%s210 + $0x1c] sm:$0xf]
        %v225 = vld [vmem:[%s210 + $0x20] sm:$0xf]
        %v226 = vld [vmem:[%s210 + $0x24] sm:$0xf]
        %v227 = vld [vmem:[%s210 + $0x28] sm:$0xf]
        %v228 = vld [vmem:[%s210 + $0x2c] sm:$0xf]
        %v229 = vld [vmem:[%s210 + $0x30] sm:$0xf]
        %v230 = vld [vmem:[%s210 + $0x34] sm:$0xf]
        %v231 = vld [vmem:[%s210 + $0x38] sm:$0xf]
        %v232 = vld [vmem:[%s210 + $0x3c] sm:$0xf]
        %v233 = vld [vmem:[%s2] sm:$0xf]
        %v234 = vld [vmem:[%s2 + $0x4] sm:$0xf]
        %v235 = vld [vmem:[%s2 + $0x8] sm:$0xf]
        %v236 = vld [vmem:[%s2 + $0xc] sm:$0xf]
        %v237 = vld [vmem:[%s2 + $0x10] sm:$0xf]
        %v238 = vld [vmem:[%s2 + $0x14] sm:$0xf]
        %s239 = scalar_lea.vmem %s210, 4
        %v240 = vld [vmem:[%s239] sm:$0xf]
        %v241 = vld [vmem:[%s239 + $0x4] sm:$0xf]
        %v242 = vld [vmem:[%s239 + $0x8] sm:$0xf]
        %v243 = vld [vmem:[%s239 + $0xc] sm:$0xf]
        %v244 = vld [vmem:[%s239 + $0x10] sm:$0xf]
        %v245 = vld [vmem:[%s239 + $0x14] sm:$0xf]
        %v246 = vld [vmem:[%s239 + $0x18] sm:$0xf]
        %v247 = vld [vmem:[%s239 + $0x1c] sm:$0xf]
        %v248 = vld [vmem:[%s239 + $0x20] sm:$0xf]
        %v249 = vld [vmem:[%s239 + $0x24] sm:$0xf]
        %v250 = vld [vmem:[%s239 + $0x28] sm:$0xf]
        %v251 = vld [vmem:[%s239 + $0x2c] sm:$0xf]
        %v252 = vld [vmem:[%s239 + $0x30] sm:$0xf]
        %v253 = vld [vmem:[%s239 + $0x34] sm:$0xf]
        %v254 = vld [vmem:[%s239 + $0x38] sm:$0xf]
        %v255 = vld [vmem:[%s239 + $0x3c] sm:$0xf]
        %s256 = scalar_lea.vmem %s2, 24
        %v257 = vld [vmem:[%s256] sm:$0xf]
        %v258 = vld [vmem:[%s256 + $0x4] sm:$0xf]
        %v259 = vld [vmem:[%s256 + $0x8] sm:$0xf]
        %v260 = vld [vmem:[%s256 + $0xc] sm:$0xf]
        %v261 = vld [vmem:[%s256 + $0x10] sm:$0xf]
        %v262 = vld [vmem:[%s256 + $0x14] sm:$0xf]
        %v279 = vunpack.c.l.b16 %v240
        %v280 = vunpack.c.l.b16 %v241
        %v281 = vunpack.c.l.b16 %v242
        %v282 = vunpack.c.l.b16 %v243
        %v283 = vunpack.c.l.b16 %v244
        %v284 = vunpack.c.l.b16 %v245
        %v285 = vunpack.c.l.b16 %v246
        %v286 = vunpack.c.l.b16 %v247
        %v287 = vunpack.c.l.b16 %v248
        %v288 = vunpack.c.l.b16 %v249
        %v289 = vunpack.c.l.b16 %v250
        %v290 = vunpack.c.l.b16 %v251
        %v291 = vunpack.c.l.b16 %v252
        %v292 = vunpack.c.l.b16 %v253
        %v293 = vunpack.c.l.b16 %v254
        %v294 = vunpack.c.l.b16 %v255
        %v295 = vpack.c.b16 %v280, %v279
        %v296 = vpack.c.b16 %v282, %v281
        %v297 = vpack.c.b16 %v284, %v283
        %v298 = vpack.c.b16 %v286, %v285
        %v299 = vpack.c.b16 %v288, %v287
        %v300 = vpack.c.b16 %v290, %v289
        %v301 = vpack.c.b16 %v292, %v291
        %v302 = vpack.c.b16 %v294, %v293
        %v309 = vunpack.c.l.b16 %v257
        %v310 = vunpack.c.l.b16 %v258
        %v311 = vunpack.c.l.b16 %v259
        %v312 = vunpack.c.l.b16 %v260
        %v313 = vunpack.c.l.b16 %v261
        %v314 = vunpack.c.l.b16 %v262
        %v315 = vpack.c.b16 %v310, %v309
        %v316 = vpack.c.b16 %v312, %v311
        %v317 = vpack.c.b16 %v314, %v313
        %vm321 = vcmask 392192
        %v323 = vsel %vm321, %v295, 0
        %v326 = vsel %vm321, %v296, 0
        %v329 = vsel %vm321, %v297, 0
        %v332 = vsel %vm321, %v298, 0
        %v335 = vsel %vm321, %v299, 0
        %v338 = vsel %vm321, %v300, 0
        %v341 = vsel %vm321, %v301, 0
        %v344 = vsel %vm321, %v302, 0
        %346 = vmatprep.subr.bf16.mxu0 0
        %347 = vmatpush1.bf16.msra.mxu0 0
        %348 = vmatprep.subr.bf16.mxu0 0
        %349 = vmatpush1.bf16.msra.mxu0 0
        %350 = vmatprep.subr.bf16.mxu0 0
        %351 = vmatpush1.bf16.msra.mxu0 0
        %352 = vmatprep.subr.bf16.mxu0 0
        %353 = vmatpush1.bf16.msra.mxu0 0
        %354 = vmatprep.subr.bf16.mxu0 0
        %355 = vmatpush1.bf16.msra.mxu0 0
        %356 = vmatprep.subr.bf16.mxu0 0
        %357 = vmatpush1.bf16.msra.mxu0 %v317
        %358 = vmatprep.subr.bf16.mxu0 0
        %359 = vmatpush1.bf16.msra.mxu0 %v316
        %360 = vmatprep.subr.bf16.mxu0 0
        %361 = vmatpush1.bf16.msra.mxu0 %v315
        %362 = vmatprep.subr.bf16.mxu0 0
        %363 = vmatpush2.bf16.msra.mxu0 0
        %364 = vmatprep.subr.bf16.mxu0 0
        %365 = vmatpush2.bf16.msra.mxu0 0
        %366 = vmatprep.subr.bf16.mxu0 0
        %367 = vmatpush2.bf16.msra.mxu0 0
        %368 = vmatprep.subr.bf16.mxu0 0
        %369 = vmatpush2.bf16.msra.mxu0 0
        %370 = vmatprep.subr.bf16.mxu0 0
        %371 = vmatpush2.bf16.msra.mxu0 0
        %372 = vmatprep.subr.bf16.mxu0 0
        %373 = vmatpush2.bf16.msra.mxu0 0
        %374 = vmatprep.subr.bf16.mxu0 0
        %375 = vmatpush2.bf16.msra.mxu0 0
        %376 = vmatprep.subr.bf16.mxu0 0
        %377 = vmatpush2.bf16.msra.mxu0 0
        %378 = vmatprep.mubr.bf16.mxu0 0
        %379 = vmatmul.mubr.bf16.gmra.mxu0 %v323
        %v380 = vpop.f32.mrf.mxu0
        %v381 = vadd.f32 0.0, %v380
        %v382 = vpop.f32.mrf.mxu0
        %v383 = vpop.f32.mrf.mxu0
        %v384 = vadd.f32 0.0, %v383
        %v385 = vpop.f32.mrf.mxu0
        %386 = vmatprep.mubr.bf16.mxu0 0
        %387 = vmatmul.mubr.bf16.gmra.mxu0 %v326
        %v388 = vpop.f32.mrf.mxu0
        %v389 = vadd.f32 0.0, %v388
        %v390 = vpop.f32.mrf.mxu0
        %v391 = vpop.f32.mrf.mxu0
        %v392 = vadd.f32 0.0, %v391
        %v393 = vpop.f32.mrf.mxu0
        %394 = vmatprep.mubr.bf16.mxu0 0
        %395 = vmatmul.mubr.bf16.gmra.mxu0 %v329
        %v396 = vpop.f32.mrf.mxu0
        %v397 = vadd.f32 0.0, %v396
        %v398 = vpop.f32.mrf.mxu0
        %v399 = vpop.f32.mrf.mxu0
        %v400 = vadd.f32 0.0, %v399
        %v401 = vpop.f32.mrf.mxu0
        %402 = vmatprep.mubr.bf16.mxu0 0
        %403 = vmatmul.mubr.bf16.gmra.mxu0 %v332
        %v404 = vpop.f32.mrf.mxu0
        %v405 = vadd.f32 0.0, %v404
        %v406 = vpop.f32.mrf.mxu0
        %v407 = vpop.f32.mrf.mxu0
        %v408 = vadd.f32 0.0, %v407
        %v409 = vpop.f32.mrf.mxu0
        %410 = vmatprep.mubr.bf16.mxu0 0
        %411 = vmatmul.mubr.bf16.gmra.mxu0 %v335
        %v412 = vpop.f32.mrf.mxu0
        %v413 = vadd.f32 0.0, %v412
        %v414 = vpop.f32.mrf.mxu0
        %v415 = vpop.f32.mrf.mxu0
        %v416 = vadd.f32 0.0, %v415
        %v417 = vpop.f32.mrf.mxu0
        %418 = vmatprep.mubr.bf16.mxu0 0
        %419 = vmatmul.mubr.bf16.gmra.mxu0 %v338
        %v420 = vpop.f32.mrf.mxu0
        %v421 = vadd.f32 0.0, %v420
        %v422 = vpop.f32.mrf.mxu0
        %v423 = vpop.f32.mrf.mxu0
        %v424 = vadd.f32 0.0, %v423
        %v425 = vpop.f32.mrf.mxu0
        %426 = vmatprep.mubr.bf16.mxu0 0
        %427 = vmatmul.mubr.bf16.gmra.mxu0 %v341
        %v428 = vpop.f32.mrf.mxu0
        %v429 = vadd.f32 0.0, %v428
        %v430 = vpop.f32.mrf.mxu0
        %v431 = vpop.f32.mrf.mxu0
        %v432 = vadd.f32 0.0, %v431
        %v433 = vpop.f32.mrf.mxu0
        %434 = vmatprep.mubr.bf16.mxu0 0
        %435 = vmatmul.mubr.bf16.gmra.mxu0 %v344
        %v436 = vpop.f32.mrf.mxu0
        %v437 = vadd.f32 0.0, %v436
        %v438 = vpop.f32.mrf.mxu0
        %v439 = vpop.f32.mrf.mxu0
        %v440 = vadd.f32 0.0, %v439
        %v441 = vpop.f32.mrf.mxu0
        %442 = vdwg.mxu0
        %v459 = vunpack.c.l.b16 %v217
        %v460 = vunpack.c.l.b16 %v218
        %v461 = vunpack.c.l.b16 %v219
        %v462 = vunpack.c.l.b16 %v220
        %v463 = vunpack.c.l.b16 %v221
        %v464 = vunpack.c.l.b16 %v222
        %v465 = vunpack.c.l.b16 %v223
        %v466 = vunpack.c.l.b16 %v224
        %v467 = vunpack.c.l.b16 %v225
        %v468 = vunpack.c.l.b16 %v226
        %v469 = vunpack.c.l.b16 %v227
        %v470 = vunpack.c.l.b16 %v228
        %v471 = vunpack.c.l.b16 %v229
        %v472 = vunpack.c.l.b16 %v230
        %v473 = vunpack.c.l.b16 %v231
        %v474 = vunpack.c.l.b16 %v232
        %v475 = vpack.c.b16 %v460, %v459
        %v476 = vpack.c.b16 %v462, %v461
        %v477 = vpack.c.b16 %v464, %v463
        %v478 = vpack.c.b16 %v466, %v465
        %v479 = vpack.c.b16 %v468, %v467
        %v480 = vpack.c.b16 %v470, %v469
        %v481 = vpack.c.b16 %v472, %v471
        %v482 = vpack.c.b16 %v474, %v473
        %v489 = vunpack.c.l.b16 %v233
        %v490 = vunpack.c.l.b16 %v234
        %v491 = vunpack.c.l.b16 %v235
        %v492 = vunpack.c.l.b16 %v236
        %v493 = vunpack.c.l.b16 %v237
        %v494 = vunpack.c.l.b16 %v238
        %v495 = vpack.c.b16 %v490, %v489
        %v496 = vpack.c.b16 %v492, %v491
        %v497 = vpack.c.b16 %v494, %v493
        %v502 = vsel %vm321, %v475, 0
        %v505 = vsel %vm321, %v476, 0
        %v508 = vsel %vm321, %v477, 0
        %v511 = vsel %vm321, %v478, 0
        %v514 = vsel %vm321, %v479, 0
        %v517 = vsel %vm321, %v480, 0
        %v520 = vsel %vm321, %v481, 0
        %v523 = vsel %vm321, %v482, 0
        %525 = vmatprep.subr.bf16.mxu0 0
        %526 = vmatpush1.bf16.msra.mxu0 0
        %527 = vmatprep.subr.bf16.mxu0 0
        %528 = vmatpush1.bf16.msra.mxu0 0
        %529 = vmatprep.subr.bf16.mxu0 0
        %530 = vmatpush1.bf16.msra.mxu0 0
        %531 = vmatprep.subr.bf16.mxu0 0
        %532 = vmatpush1.bf16.msra.mxu0 0
        %533 = vmatprep.subr.bf16.mxu0 0
        %534 = vmatpush1.bf16.msra.mxu0 0
        %535 = vmatprep.subr.bf16.mxu0 0
        %536 = vmatpush1.bf16.msra.mxu0 %v497
        %537 = vmatprep.subr.bf16.mxu0 0
        %538 = vmatpush1.bf16.msra.mxu0 %v496
        %539 = vmatprep.subr.bf16.mxu0 0
        %540 = vmatpush1.bf16.msra.mxu0 %v495
        %541 = vmatprep.subr.bf16.mxu0 0
        %542 = vmatpush2.bf16.msra.mxu0 0
        %543 = vmatprep.subr.bf16.mxu0 0
        %544 = vmatpush2.bf16.msra.mxu0 0
        %545 = vmatprep.subr.bf16.mxu0 0
        %546 = vmatpush2.bf16.msra.mxu0 0
        %547 = vmatprep.subr.bf16.mxu0 0
        %548 = vmatpush2.bf16.msra.mxu0 0
        %549 = vmatprep.subr.bf16.mxu0 0
        %550 = vmatpush2.bf16.msra.mxu0 0
        %551 = vmatprep.subr.bf16.mxu0 0
        %552 = vmatpush2.bf16.msra.mxu0 0
        %553 = vmatprep.subr.bf16.mxu0 0
        %554 = vmatpush2.bf16.msra.mxu0 0
        %555 = vmatprep.subr.bf16.mxu0 0
        %556 = vmatpush2.bf16.msra.mxu0 0
        %557 = vmatprep.mubr.bf16.mxu0 0
        %558 = vmatmul.mubr.bf16.gmra.mxu0 %v502
        %v559 = vpop.f32.mrf.mxu0
        %v560 = vadd.f32 %v381, %v559
        %v561 = vpop.f32.mrf.mxu0
        %v562 = vpop.f32.mrf.mxu0
        %v563 = vadd.f32 %v384, %v562
        %v564 = vpop.f32.mrf.mxu0
        %565 = vmatprep.mubr.bf16.mxu0 0
        %566 = vmatmul.mubr.bf16.gmra.mxu0 %v505
        %v567 = vpop.f32.mrf.mxu0
        %v568 = vadd.f32 %v389, %v567
        %v569 = vpop.f32.mrf.mxu0
        %v570 = vpop.f32.mrf.mxu0
        %v571 = vadd.f32 %v392, %v570
        %v572 = vpop.f32.mrf.mxu0
        %573 = vmatprep.mubr.bf16.mxu0 0
        %574 = vmatmul.mubr.bf16.gmra.mxu0 %v508
        %v575 = vpop.f32.mrf.mxu0
        %v576 = vadd.f32 %v397, %v575
        %v577 = vpop.f32.mrf.mxu0
        %v578 = vpop.f32.mrf.mxu0
        %v579 = vadd.f32 %v400, %v578
        %v580 = vpop.f32.mrf.mxu0
        %581 = vmatprep.mubr.bf16.mxu0 0
        %582 = vmatmul.mubr.bf16.gmra.mxu0 %v511
        %v583 = vpop.f32.mrf.mxu0
        %v584 = vadd.f32 %v405, %v583
        %v585 = vpop.f32.mrf.mxu0
        %v586 = vpop.f32.mrf.mxu0
        %v587 = vadd.f32 %v408, %v586
        %v588 = vpop.f32.mrf.mxu0
        %589 = vmatprep.mubr.bf16.mxu0 0
        %590 = vmatmul.mubr.bf16.gmra.mxu0 %v514
        %v591 = vpop.f32.mrf.mxu0
        %v592 = vadd.f32 %v413, %v591
        %v593 = vpop.f32.mrf.mxu0
        %v594 = vpop.f32.mrf.mxu0
        %v595 = vadd.f32 %v416, %v594
        %v596 = vpop.f32.mrf.mxu0
        %597 = vmatprep.mubr.bf16.mxu0 0
        %598 = vmatmul.mubr.bf16.gmra.mxu0 %v517
        %v599 = vpop.f32.mrf.mxu0
        %v600 = vadd.f32 %v421, %v599
        %v601 = vpop.f32.mrf.mxu0
        %v602 = vpop.f32.mrf.mxu0
        %v603 = vadd.f32 %v424, %v602
        %v604 = vpop.f32.mrf.mxu0
        %605 = vmatprep.mubr.bf16.mxu0 0
        %606 = vmatmul.mubr.bf16.gmra.mxu0 %v520
        %v607 = vpop.f32.mrf.mxu0
        %v608 = vadd.f32 %v429, %v607
        %v609 = vpop.f32.mrf.mxu0
        %v610 = vpop.f32.mrf.mxu0
        %v611 = vadd.f32 %v432, %v610
        %v612 = vpop.f32.mrf.mxu0
        %613 = vmatprep.mubr.bf16.mxu0 0
        %614 = vmatmul.mubr.bf16.gmra.mxu0 %v523
        %v615 = vpop.f32.mrf.mxu0
        %v616 = vadd.f32 %v437, %v615
        %v617 = vpop.f32.mrf.mxu0
        %v618 = vpop.f32.mrf.mxu0
        %v619 = vadd.f32 %v440, %v618
        %v620 = vpop.f32.mrf.mxu0
        %621 = vdwg.mxu0
        %s622 = scalar_lea.vmem %s210, 8
        %v623 = vld [vmem:[%s622] sm:$0xf]
        %v624 = vld [vmem:[%s622 + $0x4] sm:$0xf]
        %v625 = vld [vmem:[%s622 + $0x8] sm:$0xf]
        %v626 = vld [vmem:[%s622 + $0xc] sm:$0xf]
        %v627 = vld [vmem:[%s622 + $0x10] sm:$0xf]
        %v628 = vld [vmem:[%s622 + $0x14] sm:$0xf]
        %v629 = vld [vmem:[%s622 + $0x18] sm:$0xf]
        %v630 = vld [vmem:[%s622 + $0x1c] sm:$0xf]
        %v631 = vld [vmem:[%s622 + $0x20] sm:$0xf]
        %v632 = vld [vmem:[%s622 + $0x24] sm:$0xf]
        %v633 = vld [vmem:[%s622 + $0x28] sm:$0xf]
        %v634 = vld [vmem:[%s622 + $0x2c] sm:$0xf]
        %v635 = vld [vmem:[%s622 + $0x30] sm:$0xf]
        %v636 = vld [vmem:[%s622 + $0x34] sm:$0xf]
        %v637 = vld [vmem:[%s622 + $0x38] sm:$0xf]
        %v638 = vld [vmem:[%s622 + $0x3c] sm:$0xf]
        %s639 = scalar_lea.vmem %s2, 48
        %v640 = vld [vmem:[%s639] sm:$0xf]
        %v641 = vld [vmem:[%s639 + $0x4] sm:$0xf]
        %v642 = vld [vmem:[%s639 + $0x8] sm:$0xf]
        %v643 = vld [vmem:[%s639 + $0xc] sm:$0xf]
        %v644 = vld [vmem:[%s639 + $0x10] sm:$0xf]
        %v645 = vld [vmem:[%s639 + $0x14] sm:$0xf]
        %v662 = vunpack.c.l.b16 %v623
        %v663 = vunpack.c.l.b16 %v624
        %v664 = vunpack.c.l.b16 %v625
        %v665 = vunpack.c.l.b16 %v626
        %v666 = vunpack.c.l.b16 %v627
        %v667 = vunpack.c.l.b16 %v628
        %v668 = vunpack.c.l.b16 %v629
        %v669 = vunpack.c.l.b16 %v630
        %v670 = vunpack.c.l.b16 %v631
        %v671 = vunpack.c.l.b16 %v632
        %v672 = vunpack.c.l.b16 %v633
        %v673 = vunpack.c.l.b16 %v634
        %v674 = vunpack.c.l.b16 %v635
        %v675 = vunpack.c.l.b16 %v636
        %v676 = vunpack.c.l.b16 %v637
        %v677 = vunpack.c.l.b16 %v638
        %v678 = vpack.c.b16 %v663, %v662
        %v679 = vpack.c.b16 %v665, %v664
        %v680 = vpack.c.b16 %v667, %v666
        %v681 = vpack.c.b16 %v669, %v668
        %v682 = vpack.c.b16 %v671, %v670
        %v683 = vpack.c.b16 %v673, %v672
        %v684 = vpack.c.b16 %v675, %v674
        %v685 = vpack.c.b16 %v677, %v676
        %v692 = vunpack.c.l.b16 %v640
        %v693 = vunpack.c.l.b16 %v641
        %v694 = vunpack.c.l.b16 %v642
        %v695 = vunpack.c.l.b16 %v643
        %v696 = vunpack.c.l.b16 %v644
        %v697 = vunpack.c.l.b16 %v645
        %v698 = vpack.c.b16 %v693, %v692
        %v699 = vpack.c.b16 %v695, %v694
        %v700 = vpack.c.b16 %v697, %v696
        %v705 = vsel %vm321, %v678, 0
        %v708 = vsel %vm321, %v679, 0
        %v711 = vsel %vm321, %v680, 0
        %v714 = vsel %vm321, %v681, 0
        %v717 = vsel %vm321, %v682, 0
        %v720 = vsel %vm321, %v683, 0
        %v723 = vsel %vm321, %v684, 0
        %v726 = vsel %vm321, %v685, 0
        %728 = vmatprep.subr.bf16.mxu0 0
        %729 = vmatpush1.bf16.msra.mxu0 0
        %730 = vmatprep.subr.bf16.mxu0 0
        %731 = vmatpush1.bf16.msra.mxu0 0
        %732 = vmatprep.subr.bf16.mxu0 0
        %733 = vmatpush1.bf16.msra.mxu0 0
        %734 = vmatprep.subr.bf16.mxu0 0
        %735 = vmatpush1.bf16.msra.mxu0 0
        %736 = vmatprep.subr.bf16.mxu0 0
        %737 = vmatpush1.bf16.msra.mxu0 0
        %738 = vmatprep.subr.bf16.mxu0 0
        %739 = vmatpush1.bf16.msra.mxu0 %v700
        %740 = vmatprep.subr.bf16.mxu0 0
        %741 = vmatpush1.bf16.msra.mxu0 %v699
        %742 = vmatprep.subr.bf16.mxu0 0
        %743 = vmatpush1.bf16.msra.mxu0 %v698
        %744 = vmatprep.subr.bf16.mxu0 0
        %745 = vmatpush2.bf16.msra.mxu0 0
        %746 = vmatprep.subr.bf16.mxu0 0
        %747 = vmatpush2.bf16.msra.mxu0 0
        %748 = vmatprep.subr.bf16.mxu0 0
        %749 = vmatpush2.bf16.msra.mxu0 0
        %750 = vmatprep.subr.bf16.mxu0 0
        %751 = vmatpush2.bf16.msra.mxu0 0
        %752 = vmatprep.subr.bf16.mxu0 0
        %753 = vmatpush2.bf16.msra.mxu0 0
        %754 = vmatprep.subr.bf16.mxu0 0
        %755 = vmatpush2.bf16.msra.mxu0 0
        %756 = vmatprep.subr.bf16.mxu0 0
        %757 = vmatpush2.bf16.msra.mxu0 0
        %758 = vmatprep.subr.bf16.mxu0 0
        %759 = vmatpush2.bf16.msra.mxu0 0
        %760 = vmatprep.mubr.bf16.mxu0 0
        %761 = vmatmul.mubr.bf16.gmra.mxu0 %v705
        %v762 = vpop.f32.mrf.mxu0
        %v763 = vadd.f32 0.0, %v762
        %v764 = vpop.f32.mrf.mxu0
        %v765 = vpop.f32.mrf.mxu0
        %v766 = vadd.f32 0.0, %v765
        %v767 = vpop.f32.mrf.mxu0
        %768 = vmatprep.mubr.bf16.mxu0 0
        %769 = vmatmul.mubr.bf16.gmra.mxu0 %v708
        %v770 = vpop.f32.mrf.mxu0
        %v771 = vadd.f32 0.0, %v770
        %v772 = vpop.f32.mrf.mxu0
        %v773 = vpop.f32.mrf.mxu0
        %v774 = vadd.f32 0.0, %v773
        %v775 = vpop.f32.mrf.mxu0
        %776 = vmatprep.mubr.bf16.mxu0 0
        %777 = vmatmul.mubr.bf16.gmra.mxu0 %v711
        %v778 = vpop.f32.mrf.mxu0
        %v779 = vadd.f32 0.0, %v778
        %v780 = vpop.f32.mrf.mxu0
        %v781 = vpop.f32.mrf.mxu0
        %v782 = vadd.f32 0.0, %v781
        %v783 = vpop.f32.mrf.mxu0
        %784 = vmatprep.mubr.bf16.mxu0 0
        %785 = vmatmul.mubr.bf16.gmra.mxu0 %v714
        %v786 = vpop.f32.mrf.mxu0
        %v787 = vadd.f32 0.0, %v786
        %v788 = vpop.f32.mrf.mxu0
        %v789 = vpop.f32.mrf.mxu0
        %v790 = vadd.f32 0.0, %v789
        %v791 = vpop.f32.mrf.mxu0
        %792 = vmatprep.mubr.bf16.mxu0 0
        %793 = vmatmul.mubr.bf16.gmra.mxu0 %v717
        %v794 = vpop.f32.mrf.mxu0
        %v795 = vadd.f32 0.0, %v794
        %v796 = vpop.f32.mrf.mxu0
        %v797 = vpop.f32.mrf.mxu0
        %v798 = vadd.f32 0.0, %v797
        %v799 = vpop.f32.mrf.mxu0
        %800 = vmatprep.mubr.bf16.mxu0 0
        %801 = vmatmul.mubr.bf16.gmra.mxu0 %v720
        %v802 = vpop.f32.mrf.mxu0
        %v803 = vadd.f32 0.0, %v802
        %v804 = vpop.f32.mrf.mxu0
        %v805 = vpop.f32.mrf.mxu0
        %v806 = vadd.f32 0.0, %v805
        %v807 = vpop.f32.mrf.mxu0
        %808 = vmatprep.mubr.bf16.mxu0 0
        %809 = vmatmul.mubr.bf16.gmra.mxu0 %v723
        %v810 = vpop.f32.mrf.mxu0
        %v811 = vadd.f32 0.0, %v810
        %v812 = vpop.f32.mrf.mxu0
        %v813 = vpop.f32.mrf.mxu0
        %v814 = vadd.f32 0.0, %v813
        %v815 = vpop.f32.mrf.mxu0
        %816 = vmatprep.mubr.bf16.mxu0 0
        %817 = vmatmul.mubr.bf16.gmra.mxu0 %v726
        %v818 = vpop.f32.mrf.mxu0
        %v819 = vadd.f32 0.0, %v818
        %v820 = vpop.f32.mrf.mxu0
        %v821 = vpop.f32.mrf.mxu0
        %v822 = vadd.f32 0.0, %v821
        %v823 = vpop.f32.mrf.mxu0
        %824 = vdwg.mxu0
        %v825 = vadd.f32 %v560, %v763
        %v826 = vadd.f32 %v563, %v766
        %v827 = vadd.f32 %v568, %v771
        %v828 = vadd.f32 %v571, %v774
        %v829 = vadd.f32 %v576, %v779
        %v830 = vadd.f32 %v579, %v782
        %v831 = vadd.f32 %v584, %v787
        %v832 = vadd.f32 %v587, %v790
        %v833 = vadd.f32 %v592, %v795
        %v834 = vadd.f32 %v595, %v798
        %v835 = vadd.f32 %v600, %v803
        %v836 = vadd.f32 %v603, %v806
        %v837 = vadd.f32 %v608, %v811
        %v838 = vadd.f32 %v611, %v814
        %v839 = vadd.f32 %v616, %v819
        %v840 = vadd.f32 %v619, %v822
        %s841 = scalar_lea.vmem %s210, 12
        %v842 = vld [vmem:[%s841] sm:$0xf]
        %v843 = vld [vmem:[%s841 + $0x4] sm:$0xf]
        %v844 = vld [vmem:[%s841 + $0x8] sm:$0xf]
        %v845 = vld [vmem:[%s841 + $0xc] sm:$0xf]
        %v846 = vld [vmem:[%s841 + $0x10] sm:$0xf]
        %v847 = vld [vmem:[%s841 + $0x14] sm:$0xf]
        %v848 = vld [vmem:[%s841 + $0x18] sm:$0xf]
        %v849 = vld [vmem:[%s841 + $0x1c] sm:$0xf]
        %v850 = vld [vmem:[%s841 + $0x20] sm:$0xf]
        %v851 = vld [vmem:[%s841 + $0x24] sm:$0xf]
        %v852 = vld [vmem:[%s841 + $0x28] sm:$0xf]
        %v853 = vld [vmem:[%s841 + $0x2c] sm:$0xf]
        %v854 = vld [vmem:[%s841 + $0x30] sm:$0xf]
        %v855 = vld [vmem:[%s841 + $0x34] sm:$0xf]
        %v856 = vld [vmem:[%s841 + $0x38] sm:$0xf]
        %v857 = vld [vmem:[%s841 + $0x3c] sm:$0xf]
        %s858 = scalar_lea.vmem %s2, 72
        %v859 = vld [vmem:[%s858] sm:$0xf]
        %v860 = vld [vmem:[%s858 + $0x4] sm:$0xf]
        %v861 = vld [vmem:[%s858 + $0x8] sm:$0xf]
        %v862 = vld [vmem:[%s858 + $0xc] sm:$0xf]
        %v863 = vld [vmem:[%s858 + $0x10] sm:$0xf]
        %v864 = vld [vmem:[%s858 + $0x14] sm:$0xf]
        %v881 = vunpack.c.l.b16 %v842
        %v882 = vunpack.c.l.b16 %v843
        %v883 = vunpack.c.l.b16 %v844
        %v884 = vunpack.c.l.b16 %v845
        %v885 = vunpack.c.l.b16 %v846
        %v886 = vunpack.c.l.b16 %v847
        %v887 = vunpack.c.l.b16 %v848
        %v888 = vunpack.c.l.b16 %v849
        %v889 = vunpack.c.l.b16 %v850
        %v890 = vunpack.c.l.b16 %v851
        %v891 = vunpack.c.l.b16 %v852
        %v892 = vunpack.c.l.b16 %v853
        %v893 = vunpack.c.l.b16 %v854
        %v894 = vunpack.c.l.b16 %v855
        %v895 = vunpack.c.l.b16 %v856
        %v896 = vunpack.c.l.b16 %v857
        %v897 = vpack.c.b16 %v882, %v881
        %v898 = vpack.c.b16 %v884, %v883
        %v899 = vpack.c.b16 %v886, %v885
        %v900 = vpack.c.b16 %v888, %v887
        %v901 = vpack.c.b16 %v890, %v889
        %v902 = vpack.c.b16 %v892, %v891
        %v903 = vpack.c.b16 %v894, %v893
        %v904 = vpack.c.b16 %v896, %v895
        %v911 = vunpack.c.l.b16 %v859
        %v912 = vunpack.c.l.b16 %v860
        %v913 = vunpack.c.l.b16 %v861
        %v914 = vunpack.c.l.b16 %v862
        %v915 = vunpack.c.l.b16 %v863
        %v916 = vunpack.c.l.b16 %v864
        %v917 = vpack.c.b16 %v912, %v911
        %v918 = vpack.c.b16 %v914, %v913
        %v919 = vpack.c.b16 %v916, %v915
        %v924 = vsel %vm321, %v897, 0
        %v927 = vsel %vm321, %v898, 0
        %v930 = vsel %vm321, %v899, 0
        %v933 = vsel %vm321, %v900, 0
        %v936 = vsel %vm321, %v901, 0
        %v939 = vsel %vm321, %v902, 0
        %v942 = vsel %vm321, %v903, 0
        %v945 = vsel %vm321, %v904, 0
        %947 = vmatprep.subr.bf16.mxu0 0
        %948 = vmatpush1.bf16.msra.mxu0 0
        %949 = vmatprep.subr.bf16.mxu0 0
        %950 = vmatpush1.bf16.msra.mxu0 0
        %951 = vmatprep.subr.bf16.mxu0 0
        %952 = vmatpush1.bf16.msra.mxu0 0
        %953 = vmatprep.subr.bf16.mxu0 0
        %954 = vmatpush1.bf16.msra.mxu0 0
        %955 = vmatprep.subr.bf16.mxu0 0
        %956 = vmatpush1.bf16.msra.mxu0 0
        %957 = vmatprep.subr.bf16.mxu0 0
        %958 = vmatpush1.bf16.msra.mxu0 %v919
        %959 = vmatprep.subr.bf16.mxu0 0
        %960 = vmatpush1.bf16.msra.mxu0 %v918
        %961 = vmatprep.subr.bf16.mxu0 0
        %962 = vmatpush1.bf16.msra.mxu0 %v917
        %963 = vmatprep.subr.bf16.mxu0 0
        %964 = vmatpush2.bf16.msra.mxu0 0
        %965 = vmatprep.subr.bf16.mxu0 0
        %966 = vmatpush2.bf16.msra.mxu0 0
        %967 = vmatprep.subr.bf16.mxu0 0
        %968 = vmatpush2.bf16.msra.mxu0 0
        %969 = vmatprep.subr.bf16.mxu0 0
        %970 = vmatpush2.bf16.msra.mxu0 0
        %971 = vmatprep.subr.bf16.mxu0 0
        %972 = vmatpush2.bf16.msra.mxu0 0
        %973 = vmatprep.subr.bf16.mxu0 0
        %974 = vmatpush2.bf16.msra.mxu0 0
        %975 = vmatprep.subr.bf16.mxu0 0
        %976 = vmatpush2.bf16.msra.mxu0 0
        %977 = vmatprep.subr.bf16.mxu0 0
        %978 = vmatpush2.bf16.msra.mxu0 0
        %979 = vmatprep.mubr.bf16.mxu0 0
        %980 = vmatmul.mubr.bf16.gmra.mxu0 %v924
        %v981 = vpop.f32.mrf.mxu0
        %v982 = vadd.f32 0.0, %v981
        %v983 = vpop.f32.mrf.mxu0
        %v984 = vpop.f32.mrf.mxu0
        %v985 = vadd.f32 0.0, %v984
        %v986 = vpop.f32.mrf.mxu0
        %987 = vmatprep.mubr.bf16.mxu0 0
        %988 = vmatmul.mubr.bf16.gmra.mxu0 %v927
        %v989 = vpop.f32.mrf.mxu0
        %v990 = vadd.f32 0.0, %v989
        %v991 = vpop.f32.mrf.mxu0
        %v992 = vpop.f32.mrf.mxu0
        %v993 = vadd.f32 0.0, %v992
        %v994 = vpop.f32.mrf.mxu0
        %995 = vmatprep.mubr.bf16.mxu0 0
        %996 = vmatmul.mubr.bf16.gmra.mxu0 %v930
        %v997 = vpop.f32.mrf.mxu0
        %v998 = vadd.f32 0.0, %v997
        %v999 = vpop.f32.mrf.mxu0
        %v1000 = vpop.f32.mrf.mxu0
        %v1001 = vadd.f32 0.0, %v1000
        %v1002 = vpop.f32.mrf.mxu0
        %1003 = vmatprep.mubr.bf16.mxu0 0
        %1004 = vmatmul.mubr.bf16.gmra.mxu0 %v933
        %v1005 = vpop.f32.mrf.mxu0
        %v1006 = vadd.f32 0.0, %v1005
        %v1007 = vpop.f32.mrf.mxu0
        %v1008 = vpop.f32.mrf.mxu0
        %v1009 = vadd.f32 0.0, %v1008
        %v1010 = vpop.f32.mrf.mxu0
        %1011 = vmatprep.mubr.bf16.mxu0 0
        %1012 = vmatmul.mubr.bf16.gmra.mxu0 %v936
        %v1013 = vpop.f32.mrf.mxu0
        %v1014 = vadd.f32 0.0, %v1013
        %v1015 = vpop.f32.mrf.mxu0
        %v1016 = vpop.f32.mrf.mxu0
        %v1017 = vadd.f32 0.0, %v1016
        %v1018 = vpop.f32.mrf.mxu0
        %1019 = vmatprep.mubr.bf16.mxu0 0
        %1020 = vmatmul.mubr.bf16.gmra.mxu0 %v939
        %v1021 = vpop.f32.mrf.mxu0
        %v1022 = vadd.f32 0.0, %v1021
        %v1023 = vpop.f32.mrf.mxu0
        %v1024 = vpop.f32.mrf.mxu0
        %v1025 = vadd.f32 0.0, %v1024
        %v1026 = vpop.f32.mrf.mxu0
        %1027 = vmatprep.mubr.bf16.mxu0 0
        %1028 = vmatmul.mubr.bf16.gmra.mxu0 %v942
        %v1029 = vpop.f32.mrf.mxu0
        %v1030 = vadd.f32 0.0, %v1029
        %v1031 = vpop.f32.mrf.mxu0
        %v1032 = vpop.f32.mrf.mxu0
        %v1033 = vadd.f32 0.0, %v1032
        %v1034 = vpop.f32.mrf.mxu0
        %1035 = vmatprep.mubr.bf16.mxu0 0
        %1036 = vmatmul.mubr.bf16.gmra.mxu0 %v945
        %v1037 = vpop.f32.mrf.mxu0
        %v1038 = vadd.f32 0.0, %v1037
        %v1039 = vpop.f32.mrf.mxu0
        %v1040 = vpop.f32.mrf.mxu0
        %v1041 = vadd.f32 0.0, %v1040
        %v1042 = vpop.f32.mrf.mxu0
        %1043 = vdwg.mxu0
        %v1044 = vadd.f32 %v825, %v982
        %v1045 = vadd.f32 %v826, %v985
        %v1046 = vadd.f32 %v827, %v990
        %v1047 = vadd.f32 %v828, %v993
        %v1048 = vadd.f32 %v829, %v998
        %v1049 = vadd.f32 %v830, %v1001
        %v1050 = vadd.f32 %v831, %v1006
        %v1051 = vadd.f32 %v832, %v1009
        %v1052 = vadd.f32 %v833, %v1014
        %v1053 = vadd.f32 %v834, %v1017
        %v1054 = vadd.f32 %v835, %v1022
        %v1055 = vadd.f32 %v836, %v1025
        %v1056 = vadd.f32 %v837, %v1030
        %v1057 = vadd.f32 %v838, %v1033
        %v1058 = vadd.f32 %v839, %v1038
        %v1059 = vadd.f32 %v840, %v1041
        %v1060 = vld [vmem:[%s3] sm:$0x1]
        %v1062 = vlaneseq
        %v1063 = vshrl.u32 %v1062, 7
        %v1064 = vsub.s32 0, %v1063
        %v1065 = vrot.slane %v1060, %v1064
        %v1067 = vadd.f32 %v1044, %v1065
        %v1068 = vadd.f32 %v1045, %v1065
        %v1069 = vadd.f32 %v1046, %v1065
        %v1070 = vadd.f32 %v1047, %v1065
        %v1071 = vadd.f32 %v1048, %v1065
        %v1072 = vadd.f32 %v1049, %v1065
        %v1073 = vadd.f32 %v1050, %v1065
        %v1074 = vadd.f32 %v1051, %v1065
        %v1075 = vadd.f32 %v1052, %v1065
        %v1076 = vadd.f32 %v1053, %v1065
        %v1077 = vadd.f32 %v1054, %v1065
        %v1078 = vadd.f32 %v1055, %v1065
        %v1079 = vadd.f32 %v1056, %v1065
        %v1080 = vadd.f32 %v1057, %v1065
        %v1081 = vadd.f32 %v1058, %v1065
        %v1082 = vadd.f32 %v1059, %v1065
        %v1083 = vmax.f32 %v1067, 0.0
        %v1084 = vmax.f32 %v1068, 0.0
        %v1085 = vmax.f32 %v1069, 0.0
        %v1086 = vmax.f32 %v1070, 0.0
        %v1087 = vmax.f32 %v1071, 0.0
        %v1088 = vmax.f32 %v1072, 0.0
        %v1089 = vmax.f32 %v1073, 0.0
        %v1090 = vmax.f32 %v1074, 0.0
        %v1091 = vmax.f32 %v1075, 0.0
        %v1092 = vmax.f32 %v1076, 0.0
        %v1093 = vmax.f32 %v1077, 0.0
        %v1094 = vmax.f32 %v1078, 0.0
        %v1095 = vmax.f32 %v1079, 0.0
        %v1096 = vmax.f32 %v1080, 0.0
        %v1097 = vmax.f32 %v1081, 0.0
        %v1098 = vmax.f32 %v1082, 0.0
        %v1099 = vld [vmem:[%s215] sm:$0xf]
        %v1100 = vld [vmem:[%s215 + $0x4] sm:$0xf]
        %v1101 = vld [vmem:[%s215 + $0x8] sm:$0xf]
        %v1102 = vld [vmem:[%s215 + $0xc] sm:$0xf]
        %v1103 = vld [vmem:[%s215 + $0x10] sm:$0xf]
        %v1104 = vld [vmem:[%s215 + $0x14] sm:$0xf]
        %v1105 = vld [vmem:[%s215 + $0x18] sm:$0xf]
        %v1106 = vld [vmem:[%s215 + $0x1c] sm:$0xf]
        %v1107 = vld [vmem:[%s215 + $0x20] sm:$0xf]
        %v1108 = vld [vmem:[%s215 + $0x24] sm:$0xf]
        %v1109 = vld [vmem:[%s215 + $0x28] sm:$0xf]
        %v1110 = vld [vmem:[%s215 + $0x2c] sm:$0xf]
        %v1111 = vld [vmem:[%s215 + $0x30] sm:$0xf]
        %v1112 = vld [vmem:[%s215 + $0x34] sm:$0xf]
        %v1113 = vld [vmem:[%s215 + $0x38] sm:$0xf]
        %v1114 = vld [vmem:[%s215 + $0x3c] sm:$0xf]
        %s1115 = scalar_lea.vmem %s215, 4
        %v1116 = vld [vmem:[%s1115] sm:$0xf]
        %v1117 = vld [vmem:[%s1115 + $0x4] sm:$0xf]
        %v1118 = vld [vmem:[%s1115 + $0x8] sm:$0xf]
        %v1119 = vld [vmem:[%s1115 + $0xc] sm:$0xf]
        %v1120 = vld [vmem:[%s1115 + $0x10] sm:$0xf]
        %v1121 = vld [vmem:[%s1115 + $0x14] sm:$0xf]
        %v1122 = vld [vmem:[%s1115 + $0x18] sm:$0xf]
        %v1123 = vld [vmem:[%s1115 + $0x1c] sm:$0xf]
        %v1124 = vld [vmem:[%s1115 + $0x20] sm:$0xf]
        %v1125 = vld [vmem:[%s1115 + $0x24] sm:$0xf]
        %v1126 = vld [vmem:[%s1115 + $0x28] sm:$0xf]
        %v1127 = vld [vmem:[%s1115 + $0x2c] sm:$0xf]
        %v1128 = vld [vmem:[%s1115 + $0x30] sm:$0xf]
        %v1129 = vld [vmem:[%s1115 + $0x34] sm:$0xf]
        %v1130 = vld [vmem:[%s1115 + $0x38] sm:$0xf]
        %v1131 = vld [vmem:[%s1115 + $0x3c] sm:$0xf]
        %v1148 = vunpack.c.l.b16 %v1116
        %v1149 = vunpack.c.l.b16 %v1117
        %v1150 = vunpack.c.l.b16 %v1118
        %v1151 = vunpack.c.l.b16 %v1119
        %v1152 = vunpack.c.l.b16 %v1120
        %v1153 = vunpack.c.l.b16 %v1121
        %v1154 = vunpack.c.l.b16 %v1122
        %v1155 = vunpack.c.l.b16 %v1123
        %v1156 = vunpack.c.l.b16 %v1124
        %v1157 = vunpack.c.l.b16 %v1125
        %v1158 = vunpack.c.l.b16 %v1126
        %v1159 = vunpack.c.l.b16 %v1127
        %v1160 = vunpack.c.l.b16 %v1128
        %v1161 = vunpack.c.l.b16 %v1129
        %v1162 = vunpack.c.l.b16 %v1130
        %v1163 = vunpack.c.l.b16 %v1131
        %v1164 = vpack.c.b16 %v1149, %v1148
        %v1165 = vpack.c.b16 %v1151, %v1150
        %v1166 = vpack.c.b16 %v1153, %v1152
        %v1167 = vpack.c.b16 %v1155, %v1154
        %v1168 = vpack.c.b16 %v1157, %v1156
        %v1169 = vpack.c.b16 %v1159, %v1158
        %v1170 = vpack.c.b16 %v1161, %v1160
        %v1171 = vpack.c.b16 %v1163, %v1162
        %v1173 = vsel %vm321, %v1164, 0
        %v1176 = vsel %vm321, %v1165, 0
        %v1179 = vsel %vm321, %v1166, 0
        %v1182 = vsel %vm321, %v1167, 0
        %v1185 = vsel %vm321, %v1168, 0
        %v1188 = vsel %vm321, %v1169, 0
        %v1191 = vsel %vm321, %v1170, 0
        %v1194 = vsel %vm321, %v1171, 0
        %1196 = vmatprep.subr.bf16.mxu0 0
        %1197 = vmatpush1.bf16.msra.mxu0 0
        %1198 = vmatprep.subr.bf16.mxu0 0
        %1199 = vmatpush1.bf16.msra.mxu0 0
        %1200 = vmatprep.subr.bf16.mxu0 0
        %1201 = vmatpush1.bf16.msra.mxu0 0
        %1202 = vmatprep.subr.bf16.mxu0 0
        %1203 = vmatpush1.bf16.msra.mxu0 0
        %1204 = vmatprep.subr.bf16.mxu0 0
        %1205 = vmatpush1.bf16.msra.mxu0 0
        %1206 = vmatprep.subr.bf16.mxu0 0
        %1207 = vmatpush1.bf16.msra.mxu0 %v317
        %1208 = vmatprep.subr.bf16.mxu0 0
        %1209 = vmatpush1.bf16.msra.mxu0 %v316
        %1210 = vmatprep.subr.bf16.mxu0 0
        %1211 = vmatpush1.bf16.msra.mxu0 %v315
        %1212 = vmatprep.subr.bf16.mxu0 0
        %1213 = vmatpush2.bf16.msra.mxu0 0
        %1214 = vmatprep.subr.bf16.mxu0 0
        %1215 = vmatpush2.bf16.msra.mxu0 0
        %1216 = vmatprep.subr.bf16.mxu0 0
        %1217 = vmatpush2.bf16.msra.mxu0 0
        %1218 = vmatprep.subr.bf16.mxu0 0
        %1219 = vmatpush2.bf16.msra.mxu0 0
        %1220 = vmatprep.subr.bf16.mxu0 0
        %1221 = vmatpush2.bf16.msra.mxu0 0
        %1222 = vmatprep.subr.bf16.mxu0 0
        %1223 = vmatpush2.bf16.msra.mxu0 0
        %1224 = vmatprep.subr.bf16.mxu0 0
        %1225 = vmatpush2.bf16.msra.mxu0 0
        %1226 = vmatprep.subr.bf16.mxu0 0
        %1227 = vmatpush2.bf16.msra.mxu0 0
        %1228 = vmatprep.mubr.bf16.mxu0 0
        %1229 = vmatmul.mubr.bf16.gmra.mxu0 %v1173
        %v1230 = vpop.f32.mrf.mxu0
        %v1231 = vadd.f32 0.0, %v1230
        %v1232 = vpop.f32.mrf.mxu0
        %v1233 = vpop.f32.mrf.mxu0
        %v1234 = vadd.f32 0.0, %v1233
        %v1235 = vpop.f32.mrf.mxu0
        %1236 = vmatprep.mubr.bf16.mxu0 0
        %1237 = vmatmul.mubr.bf16.gmra.mxu0 %v1176
        %v1238 = vpop.f32.mrf.mxu0
        %v1239 = vadd.f32 0.0, %v1238
        %v1240 = vpop.f32.mrf.mxu0
        %v1241 = vpop.f32.mrf.mxu0
        %v1242 = vadd.f32 0.0, %v1241
        %v1243 = vpop.f32.mrf.mxu0
        %1244 = vmatprep.mubr.bf16.mxu0 0
        %1245 = vmatmul.mubr.bf16.gmra.mxu0 %v1179
        %v1246 = vpop.f32.mrf.mxu0
        %v1247 = vadd.f32 0.0, %v1246
        %v1248 = vpop.f32.mrf.mxu0
        %v1249 = vpop.f32.mrf.mxu0
        %v1250 = vadd.f32 0.0, %v1249
        %v1251 = vpop.f32.mrf.mxu0
        %1252 = vmatprep.mubr.bf16.mxu0 0
        %1253 = vmatmul.mubr.bf16.gmra.mxu0 %v1182
        %v1254 = vpop.f32.mrf.mxu0
        %v1255 = vadd.f32 0.0, %v1254
        %v1256 = vpop.f32.mrf.mxu0
        %v1257 = vpop.f32.mrf.mxu0
        %v1258 = vadd.f32 0.0, %v1257
        %v1259 = vpop.f32.mrf.mxu0
        %1260 = vmatprep.mubr.bf16.mxu0 0
        %1261 = vmatmul.mubr.bf16.gmra.mxu0 %v1185
        %v1262 = vpop.f32.mrf.mxu0
        %v1263 = vadd.f32 0.0, %v1262
        %v1264 = vpop.f32.mrf.mxu0
        %v1265 = vpop.f32.mrf.mxu0
        %v1266 = vadd.f32 0.0, %v1265
        %v1267 = vpop.f32.mrf.mxu0
        %1268 = vmatprep.mubr.bf16.mxu0 0
        %1269 = vmatmul.mubr.bf16.gmra.mxu0 %v1188
        %v1270 = vpop.f32.mrf.mxu0
        %v1271 = vadd.f32 0.0, %v1270
        %v1272 = vpop.f32.mrf.mxu0
        %v1273 = vpop.f32.mrf.mxu0
        %v1274 = vadd.f32 0.0, %v1273
        %v1275 = vpop.f32.mrf.mxu0
        %1276 = vmatprep.mubr.bf16.mxu0 0
        %1277 = vmatmul.mubr.bf16.gmra.mxu0 %v1191
        %v1278 = vpop.f32.mrf.mxu0
        %v1279 = vadd.f32 0.0, %v1278
        %v1280 = vpop.f32.mrf.mxu0
        %v1281 = vpop.f32.mrf.mxu0
        %v1282 = vadd.f32 0.0, %v1281
        %v1283 = vpop.f32.mrf.mxu0
        %1284 = vmatprep.mubr.bf16.mxu0 0
        %1285 = vmatmul.mubr.bf16.gmra.mxu0 %v1194
        %v1286 = vpop.f32.mrf.mxu0
        %v1287 = vadd.f32 0.0, %v1286
        %v1288 = vpop.f32.mrf.mxu0
        %v1289 = vpop.f32.mrf.mxu0
        %v1290 = vadd.f32 0.0, %v1289
        %v1291 = vpop.f32.mrf.mxu0
        %1292 = vdwg.mxu0
        %v1309 = vunpack.c.l.b16 %v1099
        %v1310 = vunpack.c.l.b16 %v1100
        %v1311 = vunpack.c.l.b16 %v1101
        %v1312 = vunpack.c.l.b16 %v1102
        %v1313 = vunpack.c.l.b16 %v1103
        %v1314 = vunpack.c.l.b16 %v1104
        %v1315 = vunpack.c.l.b16 %v1105
        %v1316 = vunpack.c.l.b16 %v1106
        %v1317 = vunpack.c.l.b16 %v1107
        %v1318 = vunpack.c.l.b16 %v1108
        %v1319 = vunpack.c.l.b16 %v1109
        %v1320 = vunpack.c.l.b16 %v1110
        %v1321 = vunpack.c.l.b16 %v1111
        %v1322 = vunpack.c.l.b16 %v1112
        %v1323 = vunpack.c.l.b16 %v1113
        %v1324 = vunpack.c.l.b16 %v1114
        %v1325 = vpack.c.b16 %v1310, %v1309
        %v1326 = vpack.c.b16 %v1312, %v1311
        %v1327 = vpack.c.b16 %v1314, %v1313
        %v1328 = vpack.c.b16 %v1316, %v1315
        %v1329 = vpack.c.b16 %v1318, %v1317
        %v1330 = vpack.c.b16 %v1320, %v1319
        %v1331 = vpack.c.b16 %v1322, %v1321
        %v1332 = vpack.c.b16 %v1324, %v1323
        %v1334 = vsel %vm321, %v1325, 0
        %v1337 = vsel %vm321, %v1326, 0
        %v1340 = vsel %vm321, %v1327, 0
        %v1343 = vsel %vm321, %v1328, 0
        %v1346 = vsel %vm321, %v1329, 0
        %v1349 = vsel %vm321, %v1330, 0
        %v1352 = vsel %vm321, %v1331, 0
        %v1355 = vsel %vm321, %v1332, 0
        %1357 = vmatprep.subr.bf16.mxu0 0
        %1358 = vmatpush1.bf16.msra.mxu0 0
        %1359 = vmatprep.subr.bf16.mxu0 0
        %1360 = vmatpush1.bf16.msra.mxu0 0
        %1361 = vmatprep.subr.bf16.mxu0 0
        %1362 = vmatpush1.bf16.msra.mxu0 0
        %1363 = vmatprep.subr.bf16.mxu0 0
        %1364 = vmatpush1.bf16.msra.mxu0 0
        %1365 = vmatprep.subr.bf16.mxu0 0
        %1366 = vmatpush1.bf16.msra.mxu0 0
        %1367 = vmatprep.subr.bf16.mxu0 0
        %1368 = vmatpush1.bf16.msra.mxu0 %v497
        %1369 = vmatprep.subr.bf16.mxu0 0
        %1370 = vmatpush1.bf16.msra.mxu0 %v496
        %1371 = vmatprep.subr.bf16.mxu0 0
        %1372 = vmatpush1.bf16.msra.mxu0 %v495
        %1373 = vmatprep.subr.bf16.mxu0 0
        %1374 = vmatpush2.bf16.msra.mxu0 0
        %1375 = vmatprep.subr.bf16.mxu0 0
        %1376 = vmatpush2.bf16.msra.mxu0 0
        %1377 = vmatprep.subr.bf16.mxu0 0
        %1378 = vmatpush2.bf16.msra.mxu0 0
        %1379 = vmatprep.subr.bf16.mxu0 0
        %1380 = vmatpush2.bf16.msra.mxu0 0
        %1381 = vmatprep.subr.bf16.mxu0 0
        %1382 = vmatpush2.bf16.msra.mxu0 0
        %1383 = vmatprep.subr.bf16.mxu0 0
        %1384 = vmatpush2.bf16.msra.mxu0 0
        %1385 = vmatprep.subr.bf16.mxu0 0
        %1386 = vmatpush2.bf16.msra.mxu0 0
        %1387 = vmatprep.subr.bf16.mxu0 0
        %1388 = vmatpush2.bf16.msra.mxu0 0
        %1389 = vmatprep.mubr.bf16.mxu0 0
        %1390 = vmatmul.mubr.bf16.gmra.mxu0 %v1334
        %v1391 = vpop.f32.mrf.mxu0
        %v1392 = vadd.f32 %v1231, %v1391
        %v1393 = vpop.f32.mrf.mxu0
        %v1394 = vpop.f32.mrf.mxu0
        %v1395 = vadd.f32 %v1234, %v1394
        %v1396 = vpop.f32.mrf.mxu0
        %1397 = vmatprep.mubr.bf16.mxu0 0
        %1398 = vmatmul.mubr.bf16.gmra.mxu0 %v1337
        %v1399 = vpop.f32.mrf.mxu0
        %v1400 = vadd.f32 %v1239, %v1399
        %v1401 = vpop.f32.mrf.mxu0
        %v1402 = vpop.f32.mrf.mxu0
        %v1403 = vadd.f32 %v1242, %v1402
        %v1404 = vpop.f32.mrf.mxu0
        %1405 = vmatprep.mubr.bf16.mxu0 0
        %1406 = vmatmul.mubr.bf16.gmra.mxu0 %v1340
        %v1407 = vpop.f32.mrf.mxu0
        %v1408 = vadd.f32 %v1247, %v1407
        %v1409 = vpop.f32.mrf.mxu0
        %v1410 = vpop.f32.mrf.mxu0
        %v1411 = vadd.f32 %v1250, %v1410
        %v1412 = vpop.f32.mrf.mxu0
        %1413 = vmatprep.mubr.bf16.mxu0 0
        %1414 = vmatmul.mubr.bf16.gmra.mxu0 %v1343
        %v1415 = vpop.f32.mrf.mxu0
        %v1416 = vadd.f32 %v1255, %v1415
        %v1417 = vpop.f32.mrf.mxu0
        %v1418 = vpop.f32.mrf.mxu0
        %v1419 = vadd.f32 %v1258, %v1418
        %v1420 = vpop.f32.mrf.mxu0
        %1421 = vmatprep.mubr.bf16.mxu0 0
        %1422 = vmatmul.mubr.bf16.gmra.mxu0 %v1346
        %v1423 = vpop.f32.mrf.mxu0
        %v1424 = vadd.f32 %v1263, %v1423
        %v1425 = vpop.f32.mrf.mxu0
        %v1426 = vpop.f32.mrf.mxu0
        %v1427 = vadd.f32 %v1266, %v1426
        %v1428 = vpop.f32.mrf.mxu0
        %1429 = vmatprep.mubr.bf16.mxu0 0
        %1430 = vmatmul.mubr.bf16.gmra.mxu0 %v1349
        %v1431 = vpop.f32.mrf.mxu0
        %v1432 = vadd.f32 %v1271, %v1431
        %v1433 = vpop.f32.mrf.mxu0
        %v1434 = vpop.f32.mrf.mxu0
        %v1435 = vadd.f32 %v1274, %v1434
        %v1436 = vpop.f32.mrf.mxu0
        %1437 = vmatprep.mubr.bf16.mxu0 0
        %1438 = vmatmul.mubr.bf16.gmra.mxu0 %v1352
        %v1439 = vpop.f32.mrf.mxu0
        %v1440 = vadd.f32 %v1279, %v1439
        %v1441 = vpop.f32.mrf.mxu0
        %v1442 = vpop.f32.mrf.mxu0
        %v1443 = vadd.f32 %v1282, %v1442
        %v1444 = vpop.f32.mrf.mxu0
        %1445 = vmatprep.mubr.bf16.mxu0 0
        %1446 = vmatmul.mubr.bf16.gmra.mxu0 %v1355
        %v1447 = vpop.f32.mrf.mxu0
        %v1448 = vadd.f32 %v1287, %v1447
        %v1449 = vpop.f32.mrf.mxu0
        %v1450 = vpop.f32.mrf.mxu0
        %v1451 = vadd.f32 %v1290, %v1450
        %v1452 = vpop.f32.mrf.mxu0
        %1453 = vdwg.mxu0
        %s1454 = scalar_lea.vmem %s215, 8
        %v1455 = vld [vmem:[%s1454] sm:$0xf]
        %v1456 = vld [vmem:[%s1454 + $0x4] sm:$0xf]
        %v1457 = vld [vmem:[%s1454 + $0x8] sm:$0xf]
        %v1458 = vld [vmem:[%s1454 + $0xc] sm:$0xf]
        %v1459 = vld [vmem:[%s1454 + $0x10] sm:$0xf]
        %v1460 = vld [vmem:[%s1454 + $0x14] sm:$0xf]
        %v1461 = vld [vmem:[%s1454 + $0x18] sm:$0xf]
        %v1462 = vld [vmem:[%s1454 + $0x1c] sm:$0xf]
        %v1463 = vld [vmem:[%s1454 + $0x20] sm:$0xf]
        %v1464 = vld [vmem:[%s1454 + $0x24] sm:$0xf]
        %v1465 = vld [vmem:[%s1454 + $0x28] sm:$0xf]
        %v1466 = vld [vmem:[%s1454 + $0x2c] sm:$0xf]
        %v1467 = vld [vmem:[%s1454 + $0x30] sm:$0xf]
        %v1468 = vld [vmem:[%s1454 + $0x34] sm:$0xf]
        %v1469 = vld [vmem:[%s1454 + $0x38] sm:$0xf]
        %v1470 = vld [vmem:[%s1454 + $0x3c] sm:$0xf]
        %v1487 = vunpack.c.l.b16 %v1455
        %v1488 = vunpack.c.l.b16 %v1456
        %v1489 = vunpack.c.l.b16 %v1457
        %v1490 = vunpack.c.l.b16 %v1458
        %v1491 = vunpack.c.l.b16 %v1459
        %v1492 = vunpack.c.l.b16 %v1460
        %v1493 = vunpack.c.l.b16 %v1461
        %v1494 = vunpack.c.l.b16 %v1462
        %v1495 = vunpack.c.l.b16 %v1463
        %v1496 = vunpack.c.l.b16 %v1464
        %v1497 = vunpack.c.l.b16 %v1465
        %v1498 = vunpack.c.l.b16 %v1466
        %v1499 = vunpack.c.l.b16 %v1467
        %v1500 = vunpack.c.l.b16 %v1468
        %v1501 = vunpack.c.l.b16 %v1469
        %v1502 = vunpack.c.l.b16 %v1470
        %v1503 = vpack.c.b16 %v1488, %v1487
        %v1504 = vpack.c.b16 %v1490, %v1489
        %v1505 = vpack.c.b16 %v1492, %v1491
        %v1506 = vpack.c.b16 %v1494, %v1493
        %v1507 = vpack.c.b16 %v1496, %v1495
        %v1508 = vpack.c.b16 %v1498, %v1497
        %v1509 = vpack.c.b16 %v1500, %v1499
        %v1510 = vpack.c.b16 %v1502, %v1501
        %v1512 = vsel %vm321, %v1503, 0
        %v1515 = vsel %vm321, %v1504, 0
        %v1518 = vsel %vm321, %v1505, 0
        %v1521 = vsel %vm321, %v1506, 0
        %v1524 = vsel %vm321, %v1507, 0
        %v1527 = vsel %vm321, %v1508, 0
        %v1530 = vsel %vm321, %v1509, 0
        %v1533 = vsel %vm321, %v1510, 0
        %1535 = vmatprep.subr.bf16.mxu0 0
        %1536 = vmatpush1.bf16.msra.mxu0 0
        %1537 = vmatprep.subr.bf16.mxu0 0
        %1538 = vmatpush1.bf16.msra.mxu0 0
        %1539 = vmatprep.subr.bf16.mxu0 0
        %1540 = vmatpush1.bf16.msra.mxu0 0
        %1541 = vmatprep.subr.bf16.mxu0 0
        %1542 = vmatpush1.bf16.msra.mxu0 0
        %1543 = vmatprep.subr.bf16.mxu0 0
        %1544 = vmatpush1.bf16.msra.mxu0 0
        %1545 = vmatprep.subr.bf16.mxu0 0
        %1546 = vmatpush1.bf16.msra.mxu0 %v700
        %1547 = vmatprep.subr.bf16.mxu0 0
        %1548 = vmatpush1.bf16.msra.mxu0 %v699
        %1549 = vmatprep.subr.bf16.mxu0 0
        %1550 = vmatpush1.bf16.msra.mxu0 %v698
        %1551 = vmatprep.subr.bf16.mxu0 0
        %1552 = vmatpush2.bf16.msra.mxu0 0
        %1553 = vmatprep.subr.bf16.mxu0 0
        %1554 = vmatpush2.bf16.msra.mxu0 0
        %1555 = vmatprep.subr.bf16.mxu0 0
        %1556 = vmatpush2.bf16.msra.mxu0 0
        %1557 = vmatprep.subr.bf16.mxu0 0
        %1558 = vmatpush2.bf16.msra.mxu0 0
        %1559 = vmatprep.subr.bf16.mxu0 0
        %1560 = vmatpush2.bf16.msra.mxu0 0
        %1561 = vmatprep.subr.bf16.mxu0 0
        %1562 = vmatpush2.bf16.msra.mxu0 0
        %1563 = vmatprep.subr.bf16.mxu0 0
        %1564 = vmatpush2.bf16.msra.mxu0 0
        %1565 = vmatprep.subr.bf16.mxu0 0
        %1566 = vmatpush2.bf16.msra.mxu0 0
        %1567 = vmatprep.mubr.bf16.mxu0 0
        %1568 = vmatmul.mubr.bf16.gmra.mxu0 %v1512
        %v1569 = vpop.f32.mrf.mxu0
        %v1570 = vadd.f32 0.0, %v1569
        %v1571 = vpop.f32.mrf.mxu0
        %v1572 = vpop.f32.mrf.mxu0
        %v1573 = vadd.f32 0.0, %v1572
        %v1574 = vpop.f32.mrf.mxu0
        %1575 = vmatprep.mubr.bf16.mxu0 0
        %1576 = vmatmul.mubr.bf16.gmra.mxu0 %v1515
        %v1577 = vpop.f32.mrf.mxu0
        %v1578 = vadd.f32 0.0, %v1577
        %v1579 = vpop.f32.mrf.mxu0
        %v1580 = vpop.f32.mrf.mxu0
        %v1581 = vadd.f32 0.0, %v1580
        %v1582 = vpop.f32.mrf.mxu0
        %1583 = vmatprep.mubr.bf16.mxu0 0
        %1584 = vmatmul.mubr.bf16.gmra.mxu0 %v1518
        %v1585 = vpop.f32.mrf.mxu0
        %v1586 = vadd.f32 0.0, %v1585
        %v1587 = vpop.f32.mrf.mxu0
        %v1588 = vpop.f32.mrf.mxu0
        %v1589 = vadd.f32 0.0, %v1588
        %v1590 = vpop.f32.mrf.mxu0
        %1591 = vmatprep.mubr.bf16.mxu0 0
        %1592 = vmatmul.mubr.bf16.gmra.mxu0 %v1521
        %v1593 = vpop.f32.mrf.mxu0
        %v1594 = vadd.f32 0.0, %v1593
        %v1595 = vpop.f32.mrf.mxu0
        %v1596 = vpop.f32.mrf.mxu0
        %v1597 = vadd.f32 0.0, %v1596
        %v1598 = vpop.f32.mrf.mxu0
        %1599 = vmatprep.mubr.bf16.mxu0 0
        %1600 = vmatmul.mubr.bf16.gmra.mxu0 %v1524
        %v1601 = vpop.f32.mrf.mxu0
        %v1602 = vadd.f32 0.0, %v1601
        %v1603 = vpop.f32.mrf.mxu0
        %v1604 = vpop.f32.mrf.mxu0
        %v1605 = vadd.f32 0.0, %v1604
        %v1606 = vpop.f32.mrf.mxu0
        %1607 = vmatprep.mubr.bf16.mxu0 0
        %1608 = vmatmul.mubr.bf16.gmra.mxu0 %v1527
        %v1609 = vpop.f32.mrf.mxu0
        %v1610 = vadd.f32 0.0, %v1609
        %v1611 = vpop.f32.mrf.mxu0
        %v1612 = vpop.f32.mrf.mxu0
        %v1613 = vadd.f32 0.0, %v1612
        %v1614 = vpop.f32.mrf.mxu0
        %1615 = vmatprep.mubr.bf16.mxu0 0
        %1616 = vmatmul.mubr.bf16.gmra.mxu0 %v1530
        %v1617 = vpop.f32.mrf.mxu0
        %v1618 = vadd.f32 0.0, %v1617
        %v1619 = vpop.f32.mrf.mxu0
        %v1620 = vpop.f32.mrf.mxu0
        %v1621 = vadd.f32 0.0, %v1620
        %v1622 = vpop.f32.mrf.mxu0
        %1623 = vmatprep.mubr.bf16.mxu0 0
        %1624 = vmatmul.mubr.bf16.gmra.mxu0 %v1533
        %v1625 = vpop.f32.mrf.mxu0
        %v1626 = vadd.f32 0.0, %v1625
        %v1627 = vpop.f32.mrf.mxu0
        %v1628 = vpop.f32.mrf.mxu0
        %v1629 = vadd.f32 0.0, %v1628
        %v1630 = vpop.f32.mrf.mxu0
        %1631 = vdwg.mxu0
        %v1632 = vadd.f32 %v1392, %v1570
        %v1633 = vadd.f32 %v1395, %v1573
        %v1634 = vadd.f32 %v1400, %v1578
        %v1635 = vadd.f32 %v1403, %v1581
        %v1636 = vadd.f32 %v1408, %v1586
        %v1637 = vadd.f32 %v1411, %v1589
        %v1638 = vadd.f32 %v1416, %v1594
        %v1639 = vadd.f32 %v1419, %v1597
        %v1640 = vadd.f32 %v1424, %v1602
        %v1641 = vadd.f32 %v1427, %v1605
        %v1642 = vadd.f32 %v1432, %v1610
        %v1643 = vadd.f32 %v1435, %v1613
        %v1644 = vadd.f32 %v1440, %v1618
        %v1645 = vadd.f32 %v1443, %v1621
        %v1646 = vadd.f32 %v1448, %v1626
        %v1647 = vadd.f32 %v1451, %v1629
        %s1648 = scalar_lea.vmem %s215, 12
        %v1649 = vld [vmem:[%s1648] sm:$0xf]
        %v1650 = vld [vmem:[%s1648 + $0x4] sm:$0xf]
        %v1651 = vld [vmem:[%s1648 + $0x8] sm:$0xf]
        %v1652 = vld [vmem:[%s1648 + $0xc] sm:$0xf]
        %v1653 = vld [vmem:[%s1648 + $0x10] sm:$0xf]
        %v1654 = vld [vmem:[%s1648 + $0x14] sm:$0xf]
        %v1655 = vld [vmem:[%s1648 + $0x18] sm:$0xf]
        %v1656 = vld [vmem:[%s1648 + $0x1c] sm:$0xf]
        %v1657 = vld [vmem:[%s1648 + $0x20] sm:$0xf]
        %v1658 = vld [vmem:[%s1648 + $0x24] sm:$0xf]
        %v1659 = vld [vmem:[%s1648 + $0x28] sm:$0xf]
        %v1660 = vld [vmem:[%s1648 + $0x2c] sm:$0xf]
        %v1661 = vld [vmem:[%s1648 + $0x30] sm:$0xf]
        %v1662 = vld [vmem:[%s1648 + $0x34] sm:$0xf]
        %v1663 = vld [vmem:[%s1648 + $0x38] sm:$0xf]
        %v1664 = vld [vmem:[%s1648 + $0x3c] sm:$0xf]
        %v1681 = vunpack.c.l.b16 %v1649
        %v1682 = vunpack.c.l.b16 %v1650
        %v1683 = vunpack.c.l.b16 %v1651
        %v1684 = vunpack.c.l.b16 %v1652
        %v1685 = vunpack.c.l.b16 %v1653
        %v1686 = vunpack.c.l.b16 %v1654
        %v1687 = vunpack.c.l.b16 %v1655
        %v1688 = vunpack.c.l.b16 %v1656
        %v1689 = vunpack.c.l.b16 %v1657
        %v1690 = vunpack.c.l.b16 %v1658
        %v1691 = vunpack.c.l.b16 %v1659
        %v1692 = vunpack.c.l.b16 %v1660
        %v1693 = vunpack.c.l.b16 %v1661
        %v1694 = vunpack.c.l.b16 %v1662
        %v1695 = vunpack.c.l.b16 %v1663
        %v1696 = vunpack.c.l.b16 %v1664
        %v1697 = vpack.c.b16 %v1682, %v1681
        %v1698 = vpack.c.b16 %v1684, %v1683
        %v1699 = vpack.c.b16 %v1686, %v1685
        %v1700 = vpack.c.b16 %v1688, %v1687
        %v1701 = vpack.c.b16 %v1690, %v1689
        %v1702 = vpack.c.b16 %v1692, %v1691
        %v1703 = vpack.c.b16 %v1694, %v1693
        %v1704 = vpack.c.b16 %v1696, %v1695
        %v1706 = vsel %vm321, %v1697, 0
        %v1709 = vsel %vm321, %v1698, 0
        %v1712 = vsel %vm321, %v1699, 0
        %v1715 = vsel %vm321, %v1700, 0
        %v1718 = vsel %vm321, %v1701, 0
        %v1721 = vsel %vm321, %v1702, 0
        %v1724 = vsel %vm321, %v1703, 0
        %v1727 = vsel %vm321, %v1704, 0
        %1729 = vmatprep.subr.bf16.mxu0 0
        %1730 = vmatpush1.bf16.msra.mxu0 0
        %1731 = vmatprep.subr.bf16.mxu0 0
        %1732 = vmatpush1.bf16.msra.mxu0 0
        %1733 = vmatprep.subr.bf16.mxu0 0
        %1734 = vmatpush1.bf16.msra.mxu0 0
        %1735 = vmatprep.subr.bf16.mxu0 0
        %1736 = vmatpush1.bf16.msra.mxu0 0
        %1737 = vmatprep.subr.bf16.mxu0 0
        %1738 = vmatpush1.bf16.msra.mxu0 0
        %1739 = vmatprep.subr.bf16.mxu0 0
        %1740 = vmatpush1.bf16.msra.mxu0 %v919
        %1741 = vmatprep.subr.bf16.mxu0 0
        %1742 = vmatpush1.bf16.msra.mxu0 %v918
        %1743 = vmatprep.subr.bf16.mxu0 0
        %1744 = vmatpush1.bf16.msra.mxu0 %v917
        %1745 = vmatprep.subr.bf16.mxu0 0
        %1746 = vmatpush2.bf16.msra.mxu0 0
        %1747 = vmatprep.subr.bf16.mxu0 0
        %1748 = vmatpush2.bf16.msra.mxu0 0
        %1749 = vmatprep.subr.bf16.mxu0 0
        %1750 = vmatpush2.bf16.msra.mxu0 0
        %1751 = vmatprep.subr.bf16.mxu0 0
        %1752 = vmatpush2.bf16.msra.mxu0 0
        %1753 = vmatprep.subr.bf16.mxu0 0
        %1754 = vmatpush2.bf16.msra.mxu0 0
        %1755 = vmatprep.subr.bf16.mxu0 0
        %1756 = vmatpush2.bf16.msra.mxu0 0
        %1757 = vmatprep.subr.bf16.mxu0 0
        %1758 = vmatpush2.bf16.msra.mxu0 0
        %1759 = vmatprep.subr.bf16.mxu0 0
        %1760 = vmatpush2.bf16.msra.mxu0 0
        %1761 = vmatprep.mubr.bf16.mxu0 0
        %1762 = vmatmul.mubr.bf16.gmra.mxu0 %v1706
        %v1763 = vpop.f32.mrf.mxu0
        %v1764 = vadd.f32 0.0, %v1763
        %v1765 = vpop.f32.mrf.mxu0
        %v1766 = vpop.f32.mrf.mxu0
        %v1767 = vadd.f32 0.0, %v1766
        %v1768 = vpop.f32.mrf.mxu0
        %1769 = vmatprep.mubr.bf16.mxu0 0
        %1770 = vmatmul.mubr.bf16.gmra.mxu0 %v1709
        %v1771 = vpop.f32.mrf.mxu0
        %v1772 = vadd.f32 0.0, %v1771
        %v1773 = vpop.f32.mrf.mxu0
        %v1774 = vpop.f32.mrf.mxu0
        %v1775 = vadd.f32 0.0, %v1774
        %v1776 = vpop.f32.mrf.mxu0
        %1777 = vmatprep.mubr.bf16.mxu0 0
        %1778 = vmatmul.mubr.bf16.gmra.mxu0 %v1712
        %v1779 = vpop.f32.mrf.mxu0
        %v1780 = vadd.f32 0.0, %v1779
        %v1781 = vpop.f32.mrf.mxu0
        %v1782 = vpop.f32.mrf.mxu0
        %v1783 = vadd.f32 0.0, %v1782
        %v1784 = vpop.f32.mrf.mxu0
        %1785 = vmatprep.mubr.bf16.mxu0 0
        %1786 = vmatmul.mubr.bf16.gmra.mxu0 %v1715
        %v1787 = vpop.f32.mrf.mxu0
        %v1788 = vadd.f32 0.0, %v1787
        %v1789 = vpop.f32.mrf.mxu0
        %v1790 = vpop.f32.mrf.mxu0
        %v1791 = vadd.f32 0.0, %v1790
        %v1792 = vpop.f32.mrf.mxu0
        %1793 = vmatprep.mubr.bf16.mxu0 0
        %1794 = vmatmul.mubr.bf16.gmra.mxu0 %v1718
        %v1795 = vpop.f32.mrf.mxu0
        %v1796 = vadd.f32 0.0, %v1795
        %v1797 = vpop.f32.mrf.mxu0
        %v1798 = vpop.f32.mrf.mxu0
        %v1799 = vadd.f32 0.0, %v1798
        %v1800 = vpop.f32.mrf.mxu0
        %1801 = vmatprep.mubr.bf16.mxu0 0
        %1802 = vmatmul.mubr.bf16.gmra.mxu0 %v1721
        %v1803 = vpop.f32.mrf.mxu0
        %v1804 = vadd.f32 0.0, %v1803
        %v1805 = vpop.f32.mrf.mxu0
        %v1806 = vpop.f32.mrf.mxu0
        %v1807 = vadd.f32 0.0, %v1806
        %v1808 = vpop.f32.mrf.mxu0
        %1809 = vmatprep.mubr.bf16.mxu0 0
        %1810 = vmatmul.mubr.bf16.gmra.mxu0 %v1724
        %v1811 = vpop.f32.mrf.mxu0
        %v1812 = vadd.f32 0.0, %v1811
        %v1813 = vpop.f32.mrf.mxu0
        %v1814 = vpop.f32.mrf.mxu0
        %v1815 = vadd.f32 0.0, %v1814
        %v1816 = vpop.f32.mrf.mxu0
        %1817 = vmatprep.mubr.bf16.mxu0 0
        %1818 = vmatmul.mubr.bf16.gmra.mxu0 %v1727
        %v1819 = vpop.f32.mrf.mxu0
        %v1820 = vadd.f32 0.0, %v1819
        %v1821 = vpop.f32.mrf.mxu0
        %v1822 = vpop.f32.mrf.mxu0
        %v1823 = vadd.f32 0.0, %v1822
        %v1824 = vpop.f32.mrf.mxu0
        %1825 = vdwg.mxu0
        %v1826 = vadd.f32 %v1632, %v1764
        %v1827 = vadd.f32 %v1633, %v1767
        %v1828 = vadd.f32 %v1634, %v1772
        %v1829 = vadd.f32 %v1635, %v1775
        %v1830 = vadd.f32 %v1636, %v1780
        %v1831 = vadd.f32 %v1637, %v1783
        %v1832 = vadd.f32 %v1638, %v1788
        %v1833 = vadd.f32 %v1639, %v1791
        %v1834 = vadd.f32 %v1640, %v1796
        %v1835 = vadd.f32 %v1641, %v1799
        %v1836 = vadd.f32 %v1642, %v1804
        %v1837 = vadd.f32 %v1643, %v1807
        %v1838 = vadd.f32 %v1644, %v1812
        %v1839 = vadd.f32 %v1645, %v1815
        %v1840 = vadd.f32 %v1646, %v1820
        %v1841 = vadd.f32 %v1647, %v1823
        %v1842 = vadd.f32 %v1826, %v1065
        %v1843 = vadd.f32 %v1827, %v1065
        %v1844 = vadd.f32 %v1828, %v1065
        %v1845 = vadd.f32 %v1829, %v1065
        %v1846 = vadd.f32 %v1830, %v1065
        %v1847 = vadd.f32 %v1831, %v1065
        %v1848 = vadd.f32 %v1832, %v1065
        %v1849 = vadd.f32 %v1833, %v1065
        %v1850 = vadd.f32 %v1834, %v1065
        %v1851 = vadd.f32 %v1835, %v1065
        %v1852 = vadd.f32 %v1836, %v1065
        %v1853 = vadd.f32 %v1837, %v1065
        %v1854 = vadd.f32 %v1838, %v1065
        %v1855 = vadd.f32 %v1839, %v1065
        %v1856 = vadd.f32 %v1840, %v1065
        %v1857 = vadd.f32 %v1841, %v1065
        %v1858 = vmax.f32 %v1842, 0.0
        %v1859 = vmax.f32 %v1843, 0.0
        %v1860 = vmax.f32 %v1844, 0.0
        %v1861 = vmax.f32 %v1845, 0.0
        %v1862 = vmax.f32 %v1846, 0.0
        %v1863 = vmax.f32 %v1847, 0.0
        %v1864 = vmax.f32 %v1848, 0.0
        %v1865 = vmax.f32 %v1849, 0.0
        %v1866 = vmax.f32 %v1850, 0.0
        %v1867 = vmax.f32 %v1851, 0.0
        %v1868 = vmax.f32 %v1852, 0.0
        %v1869 = vmax.f32 %v1853, 0.0
        %v1870 = vmax.f32 %v1854, 0.0
        %v1871 = vmax.f32 %v1855, 0.0
        %v1872 = vmax.f32 %v1856, 0.0
        %v1873 = vmax.f32 %v1857, 0.0
        %v1890 = vrot.slane %v1858, 7
        %v1891 = vrot.slane %v1859, 7
        %v1892 = vrot.slane %v1860, 7
        %v1893 = vrot.slane %v1861, 7
        %v1894 = vrot.slane %v1862, 7
        %v1895 = vrot.slane %v1863, 7
        %v1896 = vrot.slane %v1864, 7
        %v1897 = vrot.slane %v1865, 7
        %v1898 = vrot.slane %v1866, 7
        %v1899 = vrot.slane %v1867, 7
        %v1900 = vrot.slane %v1868, 7
        %v1901 = vrot.slane %v1869, 7
        %v1902 = vrot.slane %v1870, 7
        %v1903 = vrot.slane %v1871, 7
        %v1904 = vrot.slane %v1872, 7
        %v1905 = vrot.slane %v1873, 7
        %vm1922 = vcmask 1040384
        %v1923 = vsel %vm1922, 0.0, %v1890
        %v1924 = vsel %vm1922, 0.0, %v1891
        %v1925 = vsel %vm1922, 0.0, %v1892
        %v1926 = vsel %vm1922, 0.0, %v1893
        %v1927 = vsel %vm1922, 0.0, %v1894
        %v1928 = vsel %vm1922, 0.0, %v1895
        %v1929 = vsel %vm1922, 0.0, %v1896
        %v1930 = vsel %vm1922, 0.0, %v1897
        %v1931 = vsel %vm1922, 0.0, %v1898
        %v1932 = vsel %vm1922, 0.0, %v1899
        %v1933 = vsel %vm1922, 0.0, %v1900
        %v1934 = vsel %vm1922, 0.0, %v1901
        %v1935 = vsel %vm1922, 0.0, %v1902
        %v1936 = vsel %vm1922, 0.0, %v1903
        %v1937 = vsel %vm1922, 0.0, %v1904
        %v1938 = vsel %vm1922, 0.0, %v1905
        %v1939 = vmax.f32 %v1083, %v1858
        %v1940 = vmax.f32 %v1084, %v1859
        %v1941 = vmax.f32 %v1085, %v1860
        %v1942 = vmax.f32 %v1086, %v1861
        %v1943 = vmax.f32 %v1087, %v1862
        %v1944 = vmax.f32 %v1088, %v1863
        %v1945 = vmax.f32 %v1089, %v1864
        %v1946 = vmax.f32 %v1090, %v1865
        %v1947 = vmax.f32 %v1091, %v1866
        %v1948 = vmax.f32 %v1092, %v1867
        %v1949 = vmax.f32 %v1093, %v1868
        %v1950 = vmax.f32 %v1094, %v1869
        %v1951 = vmax.f32 %v1095, %v1870
        %v1952 = vmax.f32 %v1096, %v1871
        %v1953 = vmax.f32 %v1097, %v1872
        %v1954 = vmax.f32 %v1098, %v1873
        %v1955 = vmax.f32 %v1939, %v1923
        %v1956 = vmax.f32 %v1940, %v1924
        %v1957 = vmax.f32 %v1941, %v1925
        %v1958 = vmax.f32 %v1942, %v1926
        %v1959 = vmax.f32 %v1943, %v1927
        %v1960 = vmax.f32 %v1944, %v1928
        %v1961 = vmax.f32 %v1945, %v1929
        %v1962 = vmax.f32 %v1946, %v1930
        %v1963 = vmax.f32 %v1947, %v1931
        %v1964 = vmax.f32 %v1948, %v1932
        %v1965 = vmax.f32 %v1949, %v1933
        %v1966 = vmax.f32 %v1950, %v1934
        %v1967 = vmax.f32 %v1951, %v1935
        %v1968 = vmax.f32 %v1952, %v1936
        %v1969 = vmax.f32 %v1953, %v1937
        %v1970 = vmax.f32 %v1954, %v1938
        %v1971 = vmax.f32 %v1955, %v1956
        %v1972 = vmax.f32 %v1957, %v1958
        %v1973 = vmax.f32 %v1959, %v1960
        %v1974 = vmax.f32 %v1961, %v1962
        %v1975 = vmax.f32 %v1963, %v1964
        %v1976 = vmax.f32 %v1965, %v1966
        %v1977 = vmax.f32 %v1967, %v1968
        %v1978 = vmax.f32 %v1969, %v1970
        %v1979 = vmax.f32 %v1971, 0.0
        %v1980 = vmax.f32 %v1972, %v1956
        %v1981 = vmax.f32 %v1973, %v1958
        %v1982 = vmax.f32 %v1974, %v1960
        %v1983 = vmax.f32 %v1975, %v1962
        %v1984 = vmax.f32 %v1976, %v1964
        %v1985 = vmax.f32 %v1977, %v1966
        %v1986 = vmax.f32 %v1978, %v1968
        %vm1987 = vcmask 523264
        %1988 = vst.msk [vmem:[%s205] sm:$0xff] %vm1987, %v1979
        %1989 = vst.msk [vmem:[%s205 + $0x8] sm:$0xff] %vm1987, %v1980
        %1990 = vst.msk [vmem:[%s205 + $0x10] sm:$0xff] %vm1987, %v1981
        %1991 = vst.msk [vmem:[%s205 + $0x18] sm:$0xff] %vm1987, %v1982
        %1992 = vst.msk [vmem:[%s205 + $0x20] sm:$0xff] %vm1987, %v1983
        %1993 = vst.msk [vmem:[%s205 + $0x28] sm:$0xff] %vm1987, %v1984
        %1994 = vst.msk [vmem:[%s205 + $0x30] sm:$0xff] %vm1987, %v1985
        %1995 = vst.msk [vmem:[%s205 + $0x38] sm:$0xff] %vm1987, %v1986
        %s1996 = sand.u32 %s120, 1
        %s1997 = scalar_lea.sflag [#allocation3], %s1996
        %s1998 = sand.u32 %s120, 1
        %s1999 = smul.addr %s1998, 64
        %s2000 = scalar_lea.vmem [#allocation2], %s1999
        // Predicated region
        $region37: #{visible_module_forward.1} parent=35 // pred_check
          %p2001 = pneg %p130
        $region38: #{visible_module_forward.1} parent=35 // pred_check_branch
          %2003 = sbr.rel (%p2001) target = $region40
        $region39: #{visible_module_forward.1} parent=35 // pred_region
          %s2005 = ssub.s32 1024, 1024
          %2006 = vsyncadd %s1997, %s2005
          %s2007 = smul.addr %s18, 8
          %s2008 = smul.addr %s2007, 128
          %s2009 = scalar_lea.hbm %s4, %s2008
          %s2010 = sshll.u32 %s2000, 4
          %s2011 = int_to_ptr.vmem [resolvable:$true] %s2010
          %2016 = dma.vmem_to_hbm [thread:$0]  %s2011, 1024, %s2009, %s1997, 128, 128, 8
        $region40: #{visible_module_forward.1} parent=35 // pred_fallthru
          _
      $region36: #{visible_module_forward.1} parent=5 // pred_fallthru
        _
      %p2017 = scmp.le.s32.totalorder 2, %s13
      // Predicated region
      $region41: #{visible_module_forward.1} parent=5 // pred_check
        %p2018 = pneg %p2017
      $region42: #{visible_module_forward.1} parent=5 // pred_check_branch
        %2020 = sbr.rel (%p2018) target = $region44
      $region43: #{visible_module_forward.1} parent=5 // pred_region
        %s2021 = ssub.s32 %s13, 2
        // Predicated region
        $region45: #{visible_module_forward.1} parent=43 // pred_check
          %p2022 = pneg %p136
        $region46: #{visible_module_forward.1} parent=43 // pred_check_branch
          %2024 = sbr.rel (%p2022) target = $region48
        $region47: #{visible_module_forward.1} parent=43 // pred_region
          %s2025 = sand.u32 %s121, 1
          %s2026 = scalar_lea.sflag [#allocation3], %s2025
          %s2027 = sand.u32 %s121, 1
          %s2028 = smul.addr %s2027, 64
          %s2029 = scalar_lea.vmem [#allocation2], %s2028
          %2030 = dma.done %s2026, 1024
        $region48: #{visible_module_forward.1} parent=43 // pred_fallthru
          _
      $region44: #{visible_module_forward.1} parent=5 // pred_fallthru
        _
    $region6: #{visible_module_forward.1} parent=1 // loop_footer
      %s17 = sadd.s32 1, %s13
    $region7: #{visible_module_forward.1} parent=1 // loop_footer_branch
      %12 = sbr.rel target = $region3
    $region8: #{visible_module_forward.1} parent=1 // loop_exit
      _
    %2031 = vsyncpa [#allocation3], 1
    %s2032 = scalar_lea.sflag [#allocation3], 1
    %2033 = vsyncpa %s2032, 1

</llo_original>
